<compile_context>
chip_gen: v5e
topology: v5e:2x2
jax: 0.10.0
libtpu: 0.0.40
codegen_flags: <defaults>
</compile_context>

<pallas_src>
import math

import jax
import jax.numpy as jnp
import numpy as np
from jax.experimental import pallas as pl
from jax.experimental.pallas import tpu as pltpu


def _round_up(x, m):
    return (x + m - 1) // m * m


def _embed_kernel(ids_ref, inner_ref, outer_ref, emb_tbl_ref, pe_tbl_ref, out_ref):
    # ids_ref / inner_ref / outer_ref : (1, T) int32
    # emb_tbl_ref : (V_pad, E) f32   -- already scaled by sqrt(E)
    # pe_tbl_ref  : (L, P) f32, P = E // 2
    # out_ref     : (T, E) f32
    T = ids_ref.shape[1]
    V, E = emb_tbl_ref.shape
    L, P = pe_tbl_ref.shape

    ids = ids_ref[0, :]        # (T,)
    inner = inner_ref[0, :]    # (T,)
    outer = outer_ref[0, :]    # (T,)

    # --- token embedding gather via one-hot matmul (MXU). Table is pre-scaled,
    #     so no extra multiply here. ---
    tok_iota = jax.lax.broadcasted_iota(jnp.int32, (T, V), 1)
    tok_onehot = (ids[:, None] == tok_iota).astype(jnp.float32)          # (T, V)
    emb = jnp.dot(tok_onehot, emb_tbl_ref[...],
                  preferred_element_type=jnp.float32)                    # (T, E)

    # --- fused positional-encoding gather: stack the inner/outer one-hots into
    #     one (2T, L) LHS and issue a single MXU dot against the PE table. ---
    pos_iota = jax.lax.broadcasted_iota(jnp.int32, (T, L), 1)
    inner_oh = (inner[:, None] == pos_iota).astype(jnp.float32)          # (T, L)
    outer_oh = (outer[:, None] == pos_iota).astype(jnp.float32)          # (T, L)
    pos_onehot = jnp.concatenate([inner_oh, outer_oh], axis=0)           # (2T, L)
    pe = jnp.dot(pos_onehot, pe_tbl_ref[...],
                 preferred_element_type=jnp.float32)                     # (2T, P)

    # Write the two halves directly (no feature-axis concat). Dropout is
    # identity at inference time.
    out_ref[:, :P] = emb[:, :P] + pe[:T, :]
    out_ref[:, P:] = emb[:, P:] + pe[T:, :]


def prepare_tables(emb_table, pe_table):
    """One-time parameter prep: fold sqrt(emb) into the embedding table and pad
    the vocab axis to a sublane multiple."""
    V, E = emb_table.shape
    scaled = emb_table.astype(jnp.float32) * jnp.float32(math.sqrt(E))
    V_pad = _round_up(V, 8)
    if V_pad != V:
        scaled = jnp.pad(scaled, ((0, V_pad - V), (0, 0)))
    return scaled, pe_table.astype(jnp.float32)


def _default_token_block():
    # v5e MXU is 128x128 -> 128-row LHS tiles; v6e/v7x are 256x256 -> 256 rows.
    kind = jax.devices()[0].device_kind.lower()
    return 128 if "v5" in kind else 256


def split_position_embedding(token_ids, inner_idx, outer_idx,
                             emb_table_scaled, pe_table, *, token_block=None):
    """Forward pass of `Embeddings` (linear_combination=False, eval-mode dropout).

    token_ids / inner_idx / outer_idx : (B, S) int32
    emb_table_scaled : (V_pad, E) f32, pre-scaled by sqrt(E)  (see prepare_tables)
    pe_table         : (L, P) f32 with P == E // 2
    returns          : (B, S, E) f32
    """
    B, S = token_ids.shape
    Vp, E = emb_table_scaled.shape
    L, P = pe_table.shape
    assert 2 * P == E

    T = _default_token_block() if token_block is None else token_block

    # Flatten batch x seq to one token axis, pad to a tile multiple so every
    # grid step feeds a full-height one-hot LHS to the MXU and per-step
    # overhead (~0.35 us) is amortized.
    N = B * S
    G = pl.cdiv(N, T)
    Np = G * T

    def flat_pad(a):
        a = a.reshape(N).astype(jnp.int32)
        return jnp.pad(a, (0, Np - N)).reshape(G, T)   # pad with id/pos 0 (valid rows)

    ids_f = flat_pad(token_ids)
    inner_f = flat_pad(inner_idx)
    outer_f = flat_pad(outer_idx)

    # TODO(synk): for production-sized vocabularies the resident-table one-hot
    # design should be replaced by a scalar-prefetched DMA row gather
    # (PrefetchScalarGridSpec + memory_space=pl.ANY + make_async_copy).
    out_padded = pl.pallas_call(
        _embed_kernel,
        out_shape=jax.ShapeDtypeStruct((Np, E), jnp.float32),
        grid_spec=pltpu.PrefetchScalarGridSpec(
            num_scalar_prefetch=0,
            grid=(G,),
            in_specs=[
                pl.BlockSpec((1, T), lambda g: (g, 0)),      # token ids
                pl.BlockSpec((1, T), lambda g: (g, 0)),      # inner position idx
                pl.BlockSpec((1, T), lambda g: (g, 0)),      # outer position idx
                pl.BlockSpec((Vp, E), lambda g: (0, 0)),     # embedding table (resident)
                pl.BlockSpec((L, P), lambda g: (0, 0)),      # positional table (resident)
            ],
            out_specs=pl.BlockSpec((T, E), lambda g: (g, 0)),
        ),
        compiler_params=pltpu.CompilerParams(
            dimension_semantics=("parallel",),
            vmem_limit_bytes=32 * 1024 * 1024,
        ),
    )(ids_f, inner_f, outer_f, emb_table_scaled, pe_table)

    return out_padded[:N].reshape(B, S, E)


def make_positional_encoding(max_len, position_emb_size):
    pos = np.arange(max_len, dtype=np.float32)[:, None]                   # (L, 1)
    div_term = np.exp(np.arange(0, position_emb_size, 2, dtype=np.float32)
                      * -(math.log(10000.0) / position_emb_size))         # (P/2,)
    pe = np.zeros((max_len, position_emb_size), dtype=np.float32)
    pe[:, 0::2] = np.sin(pos * div_term)
    pe[:, 1::2] = np.cos(pos * div_term)
    return jnp.asarray(pe)


def reference(token_ids, inner_idx, outer_idx, emb_table, pe_table):
    E = emb_table.shape[1]
    emb = emb_table[token_ids] * math.sqrt(E)
    pe_inner = pe_table[inner_idx]
    pe_outer = pe_table[outer_idx]
    return emb + jnp.concatenate([pe_inner, pe_outer], axis=-1)


if __name__ == "__main__":
    # Small, deterministic configuration.
    batch, seq_len = 2, 8
    emb_size = 32                 # => position_emb_size = 16 (linear_combination=False)
    vocab_size = 50
    max_len = 64

    key = jax.random.PRNGKey(0)
    k_tbl, k_ids, k_in, k_out = jax.random.split(key, 4)

    emb_table = jax.random.normal(k_tbl, (vocab_size, emb_size), dtype=jnp.float32)
    pe_table = make_positional_encoding(max_len, emb_size // 2)

    token_ids = jax.random.randint(k_ids, (batch, seq_len), 0, vocab_size, dtype=jnp.int32)
    inner_idx = jax.random.randint(k_in, (batch, seq_len), 0, max_len, dtype=jnp.int32)
    outer_idx = jax.random.randint(k_out, (batch, seq_len), 0, max_len, dtype=jnp.int32)

    emb_table_scaled, pe_table_f32 = prepare_tables(emb_table, pe_table)

    out = split_position_embedding(token_ids, inner_idx, outer_idx,
                                   emb_table_scaled, pe_table_f32)
    out = jax.block_until_ready(out)

    ref = reference(token_ids, inner_idx, outer_idx, emb_table, pe_table)
    np.testing.assert_allclose(np.asarray(out), np.asarray(ref), rtol=1e-5, atol=1e-5)

    # TODO(synk): training-mode dropout (pltpu.prng_seed + stateful_bernoulli) and
    # the linear_combination=True (Linear+Tanh) branch are not exercised here.
    print("KERNEL_OK")
</pallas_src>

<mosaic_0001>
module attributes {stable_mosaic.version = 11 : i64} {
  func.func @_embed_kernel(%arg0: i32, %arg1: memref<1x256xi32, #tpu.memory_space<vmem>>, %arg2: memref<1x256xi32, #tpu.memory_space<vmem>>, %arg3: memref<1x256xi32, #tpu.memory_space<vmem>>, %arg4: memref<56x32xf32, #tpu.memory_space<vmem>>, %arg5: memref<64x16xf32, #tpu.memory_space<vmem>>, %arg6: memref<256x32xf32, #tpu.memory_space<vmem>>) attributes {dimension_semantics = [#tpu.dimension_semantics<parallel>], iteration_bounds = array<i64: 1>, scalar_prefetch = 0 : i64, scratch_operands = 0 : i64, tpu.core_type = #tpu.core_type<tc>, window_params = [{transform_indices = @transform_0, window_bounds = array<i64: 1, 256>}, {transform_indices = @transform_1, window_bounds = array<i64: 1, 256>}, {transform_indices = @transform_2, window_bounds = array<i64: 1, 256>}, {pipeline_mode = #tpu.pipeline_mode<synchronous>, transform_indices = @transform_3, window_bounds = array<i64: 56, 32>}, {pipeline_mode = #tpu.pipeline_mode<synchronous>, transform_indices = @transform_4, window_bounds = array<i64: 64, 16>}, {transform_indices = @transform_5, window_bounds = array<i64: 256, 32>}]} {
    %c0 = arith.constant 0 : index
    %c0_0 = arith.constant 0 : index
    %0 = vector.load %arg1[%c0, %c0_0] : memref<1x256xi32, #tpu.memory_space<vmem>>, vector<1x256xi32>
    %1 = vector.shape_cast %0 : vector<1x256xi32> to vector<256xi32>
    %c0_1 = arith.constant 0 : index
    %c0_2 = arith.constant 0 : index
    %2 = vector.load %arg2[%c0_1, %c0_2] : memref<1x256xi32, #tpu.memory_space<vmem>>, vector<1x256xi32>
    %3 = vector.shape_cast %2 : vector<1x256xi32> to vector<256xi32>
    %c0_3 = arith.constant 0 : index
    %c0_4 = arith.constant 0 : index
    %4 = vector.load %arg3[%c0_3, %c0_4] : memref<1x256xi32, #tpu.memory_space<vmem>>, vector<1x256xi32>
    %5 = vector.shape_cast %4 : vector<1x256xi32> to vector<256xi32>
    %6 = tpu.iota {dimensions = array<i32: 1>} : vector<256x56xi32>
    %7 = vector.shape_cast %1 : vector<256xi32> to vector<256x1xi32>
    %8 = vector.broadcast %7 : vector<256x1xi32> to vector<256x56xi32>
    %9 = arith.cmpi eq, %8, %6 : vector<256x56xi32>
    %10 = arith.extui %9 : vector<256x56xi1> to vector<256x56xi32>
    %11 = arith.sitofp %10 : vector<256x56xi32> to vector<256x56xf32>
    %c0_5 = arith.constant 0 : index
    %c0_6 = arith.constant 0 : index
    %12 = vector.load %arg4[%c0_5, %c0_6] : memref<56x32xf32, #tpu.memory_space<vmem>>, vector<56x32xf32>
    %cst = arith.constant dense<0.000000e+00> : vector<256x32xf32>
    %13 = tpu.matmul %11, %12, %cst {dimension_numbers = #tpu.dot_dimension_numbers<[1], [0], [0], [1], [0, 0, 1, 1], [], []>} : vector<256x56xf32>, vector<56x32xf32>, vector<256x32xf32> -> vector<256x32xf32>
    %14 = tpu.iota {dimensions = array<i32: 1>} : vector<256x64xi32>
    %15 = vector.shape_cast %3 : vector<256xi32> to vector<256x1xi32>
    %16 = vector.broadcast %15 : vector<256x1xi32> to vector<256x64xi32>
    %17 = arith.cmpi eq, %16, %14 : vector<256x64xi32>
    %18 = arith.extui %17 : vector<256x64xi1> to vector<256x64xi32>
    %19 = arith.sitofp %18 : vector<256x64xi32> to vector<256x64xf32>
    %20 = vector.shape_cast %5 : vector<256xi32> to vector<256x1xi32>
    %21 = vector.broadcast %20 : vector<256x1xi32> to vector<256x64xi32>
    %22 = arith.cmpi eq, %21, %14 : vector<256x64xi32>
    %23 = arith.extui %22 : vector<256x64xi1> to vector<256x64xi32>
    %24 = arith.sitofp %23 : vector<256x64xi32> to vector<256x64xf32>
    %25 = tpu.concatenate %19, %24 in 0 : vector<256x64xf32>, vector<256x64xf32> -> vector<512x64xf32>
    %c0_7 = arith.constant 0 : index
    %c0_8 = arith.constant 0 : index
    %26 = vector.load %arg5[%c0_7, %c0_8] : memref<64x16xf32, #tpu.memory_space<vmem>>, vector<64x16xf32>
    %cst_9 = arith.constant dense<0.000000e+00> : vector<512x16xf32>
    %27 = tpu.matmul %25, %26, %cst_9 {dimension_numbers = #tpu.dot_dimension_numbers<[1], [0], [0], [1], [0, 0, 1, 1], [], []>} : vector<512x64xf32>, vector<64x16xf32>, vector<512x16xf32> -> vector<512x16xf32>
    %28 = vector.extract_strided_slice %13 {offsets = [0, 0], sizes = [256, 16], strides = [1, 1]} : vector<256x32xf32> to vector<256x16xf32>
    %29 = vector.extract_strided_slice %27 {offsets = [0, 0], sizes = [256, 16], strides = [1, 1]} : vector<512x16xf32> to vector<256x16xf32>
    %30 = arith.addf %28, %29 : vector<256x16xf32>
    %c0_10 = arith.constant 0 : index
    %c0_11 = arith.constant 0 : index
    %31 = vector.load %arg6[%c0_10, %c0_11] : memref<256x32xf32, #tpu.memory_space<vmem>>, vector<256x16xf32>
    tpu.vector_store %arg6[%c0_10, %c0_11], %30 {strides = array<i32>} : memref<256x32xf32, #tpu.memory_space<vmem>>, vector<256x16xf32>,
    %32 = vector.extract_strided_slice %13 {offsets = [0, 16], sizes = [256, 16], strides = [1, 1]} : vector<256x32xf32> to vector<256x16xf32>
    %33 = vector.extract_strided_slice %27 {offsets = [256, 0], sizes = [256, 16], strides = [1, 1]} : vector<512x16xf32> to vector<256x16xf32>
    %34 = arith.addf %32, %33 : vector<256x16xf32>
    %c0_12 = arith.constant 0 : index
    %c16 = arith.constant 16 : index
    %35 = vector.load %arg6[%c0_12, %c16] : memref<256x32xf32, #tpu.memory_space<vmem>>, vector<256x16xf32>
    tpu.vector_store %arg6[%c0_12, %c16], %34 {strides = array<i32>} : memref<256x32xf32, #tpu.memory_space<vmem>>, vector<256x16xf32>,
    return
  }
  func.func @transform_0(%arg0: i32) -> (i32, i32) {
    %c0_i32 = arith.constant 0 : i32
    %c0_i32_0 = arith.constant 0 : i32
    return %arg0, %c0_i32 : i32, i32
  }
  func.func @transform_1(%arg0: i32) -> (i32, i32) {
    %c0_i32 = arith.constant 0 : i32
    %c0_i32_0 = arith.constant 0 : i32
    return %arg0, %c0_i32 : i32, i32
  }
  func.func @transform_2(%arg0: i32) -> (i32, i32) {
    %c0_i32 = arith.constant 0 : i32
    %c0_i32_0 = arith.constant 0 : i32
    return %arg0, %c0_i32 : i32, i32
  }
  func.func @transform_3(%arg0: i32) -> (i32, i32) {
    %c0_i32 = arith.constant 0 : i32
    %c0_i32_0 = arith.constant 0 : i32
    %c0_i32_1 = arith.constant 0 : i32
    return %c0_i32, %c0_i32_0 : i32, i32
  }
  func.func @transform_4(%arg0: i32) -> (i32, i32) {
    %c0_i32 = arith.constant 0 : i32
    %c0_i32_0 = arith.constant 0 : i32
    %c0_i32_1 = arith.constant 0 : i32
    return %c0_i32, %c0_i32_0 : i32, i32
  }
  func.func @transform_5(%arg0: i32) -> (i32, i32) {
    %c0_i32 = arith.constant 0 : i32
    %c0_i32_0 = arith.constant 0 : i32
    return %arg0, %c0_i32 : i32, i32
  }
}

</mosaic_0001>

<llo_original>
// kernel: tpu_custom_call.1
$region0: #{tpu_custom_call.1}
  #allocation0 [shape = 'u32[]', space=smem, size = 0x4, offset = 0x4, fixed_abs, tag = 'smem constant byte address 0x4 - core index']
  #allocation1 [shape = 'u32[72,128]{1,0:T(1,128)}', space=vmem, size = 0x9000, scoped, tag = 'internal scratch']
  %s0 = inlined_call_operand.vmem [shape: s32[1,256], index: 0, kind: input, shape index: {}]
  %s1 = inlined_call_operand.vmem [shape: s32[1,256], index: 1, kind: input, shape index: {}]
  %s2 = inlined_call_operand.vmem [shape: s32[1,256], index: 2, kind: input, shape index: {}]
  %s3 = inlined_call_operand.vmem [shape: f32[56,32], index: 3, kind: input, shape index: {}]
  %s4 = inlined_call_operand.vmem [shape: f32[64,16], index: 4, kind: input, shape index: {}]
  %s5 = inlined_call_operand.vmem [shape: f32[256,32], index: 5, kind: output, shape index: {}]
  %s6 = sld [smem:[#allocation0]]
  $region30: #{tpu_custom_call.1} parent=0
    _
  %s8 = ssub.s32 1, %s6
  %s9 = scalar_select 0, %s8, %s6
  // Predicated region
  $region2: #{tpu_custom_call.1} parent=0 // pred_check
    _
  $region3: #{tpu_custom_call.1} parent=0 // pred_check_branch
    %11 = sbr.rel (0) target = $region5
  $region4: #{tpu_custom_call.1} parent=0 // pred_region
    _
  $region5: #{tpu_custom_call.1} parent=0 // pred_fallthru
    _
  // Predicated region
  $region6: #{tpu_custom_call.1} parent=0 // pred_check
    _
  $region7: #{tpu_custom_call.1} parent=0 // pred_check_branch
    %13 = sbr.rel (0) target = $region9
  $region8: #{tpu_custom_call.1} parent=0 // pred_region
    _
  $region9: #{tpu_custom_call.1} parent=0 // pred_fallthru
    _
  // Predicated region
  $region10: #{tpu_custom_call.1} parent=0 // pred_check
    _
  $region11: #{tpu_custom_call.1} parent=0 // pred_check_branch
    %15 = sbr.rel (0) target = $region13
  $region12: #{tpu_custom_call.1} parent=0 // pred_region
    _
  $region13: #{tpu_custom_call.1} parent=0 // pred_fallthru
    _
  // Predicated region
  $region14: #{tpu_custom_call.1} parent=0 // pred_check
    _
  $region15: #{tpu_custom_call.1} parent=0 // pred_check_branch
    %17 = sbr.rel (0) target = $region17
  $region16: #{tpu_custom_call.1} parent=0 // pred_region
    _
  $region17: #{tpu_custom_call.1} parent=0 // pred_fallthru
    _
  // Predicated region
  $region18: #{tpu_custom_call.1} parent=0 // pred_check
    _
  $region19: #{tpu_custom_call.1} parent=0 // pred_check_branch
    %19 = sbr.rel (0) target = $region21
  $region20: #{tpu_custom_call.1} parent=0 // pred_region
    _
  $region21: #{tpu_custom_call.1} parent=0 // pred_fallthru
    _
  %v20 = vld [vmem:[%s0] sm:$0x3]
  %v21 = vld [vmem:[%s1] sm:$0x3]
  %v22 = vld [vmem:[%s2] sm:$0x3]
  %v23 = vlaneseq
  %v24 = vand.u32 %v23, 127
  %v25 = vperm.slane %v20, 0
  %v26 = vperm.slane %v20, 1
  %v27 = vperm.slane %v25, 0
  %v28 = vlaneseq
  %v29 = vshrl.u32 %v28, 7
  %31 = vset.pattern.permute.xlu0 %v29
  %32 = vperm.xlu0 %31, %v27
  %v33 = vpop.permute.xlu0 %32
  %v34 = vlaneseq
  %v35 = vshrl.u32 %v34, 7
  %v36 = vadd.s32 %v35, 8
  %37 = vset.pattern.permute.xlu0 %v36
  %38 = vperm.xlu0 %37, %v27
  %v39 = vpop.permute.xlu0 %38
  %v40 = vlaneseq
  %v41 = vshrl.u32 %v40, 7
  %v42 = vadd.s32 %v41, 16
  %43 = vset.pattern.permute.xlu0 %v42
  %44 = vperm.xlu0 %43, %v27
  %v45 = vpop.permute.xlu0 %44
  %v46 = vlaneseq
  %v47 = vshrl.u32 %v46, 7
  %v48 = vadd.s32 %v47, 24
  %49 = vset.pattern.permute.xlu0 %v48
  %50 = vperm.xlu0 %49, %v27
  %v51 = vpop.permute.xlu0 %50
  %v52 = vlaneseq
  %v53 = vshrl.u32 %v52, 7
  %v54 = vadd.s32 %v53, 32
  %55 = vset.pattern.permute.xlu0 %v54
  %56 = vperm.xlu0 %55, %v27
  %v57 = vpop.permute.xlu0 %56
  %v58 = vlaneseq
  %v59 = vshrl.u32 %v58, 7
  %v60 = vadd.s32 %v59, 40
  %61 = vset.pattern.permute.xlu0 %v60
  %62 = vperm.xlu0 %61, %v27
  %v63 = vpop.permute.xlu0 %62
  %v64 = vlaneseq
  %v65 = vshrl.u32 %v64, 7
  %v66 = vadd.s32 %v65, 48
  %67 = vset.pattern.permute.xlu0 %v66
  %68 = vperm.xlu0 %67, %v27
  %v69 = vpop.permute.xlu0 %68
  %v70 = vlaneseq
  %v71 = vshrl.u32 %v70, 7
  %v72 = vadd.s32 %v71, 56
  %73 = vset.pattern.permute.xlu0 %v72
  %74 = vperm.xlu0 %73, %v27
  %v75 = vpop.permute.xlu0 %74
  %v76 = vlaneseq
  %v77 = vshrl.u32 %v76, 7
  %v78 = vadd.s32 %v77, 64
  %79 = vset.pattern.permute.xlu0 %v78
  %80 = vperm.xlu0 %79, %v27
  %v81 = vpop.permute.xlu0 %80
  %v82 = vlaneseq
  %v83 = vshrl.u32 %v82, 7
  %v84 = vadd.s32 %v83, 72
  %85 = vset.pattern.permute.xlu0 %v84
  %86 = vperm.xlu0 %85, %v27
  %v87 = vpop.permute.xlu0 %86
  %v88 = vlaneseq
  %v89 = vshrl.u32 %v88, 7
  %v90 = vadd.s32 %v89, 80
  %91 = vset.pattern.permute.xlu0 %v90
  %92 = vperm.xlu0 %91, %v27
  %v93 = vpop.permute.xlu0 %92
  %v94 = vlaneseq
  %v95 = vshrl.u32 %v94, 7
  %v96 = vadd.s32 %v95, 88
  %97 = vset.pattern.permute.xlu0 %v96
  %98 = vperm.xlu0 %97, %v27
  %v99 = vpop.permute.xlu0 %98
  %v100 = vlaneseq
  %v101 = vshrl.u32 %v100, 7
  %v102 = vadd.s32 %v101, 96
  %103 = vset.pattern.permute.xlu0 %v102
  %104 = vperm.xlu0 %103, %v27
  %v105 = vpop.permute.xlu0 %104
  %v106 = vlaneseq
  %v107 = vshrl.u32 %v106, 7
  %v108 = vadd.s32 %v107, 104
  %109 = vset.pattern.permute.xlu0 %v108
  %110 = vperm.xlu0 %109, %v27
  %v111 = vpop.permute.xlu0 %110
  %v112 = vlaneseq
  %v113 = vshrl.u32 %v112, 7
  %v114 = vadd.s32 %v113, 112
  %115 = vset.pattern.permute.xlu0 %v114
  %116 = vperm.xlu0 %115, %v27
  %v117 = vpop.permute.xlu0 %116
  %v118 = vlaneseq
  %v119 = vshrl.u32 %v118, 7
  %v120 = vadd.s32 %v119, 120
  %121 = vset.pattern.permute.xlu0 %v120
  %122 = vperm.xlu0 %121, %v27
  %v123 = vpop.permute.xlu0 %122
  %v124 = vperm.slane %v26, 0
  %v125 = vlaneseq
  %v126 = vshrl.u32 %v125, 7
  %128 = vset.pattern.permute.xlu0 %v126
  %129 = vperm.xlu0 %128, %v124
  %v130 = vpop.permute.xlu0 %129
  %v131 = vlaneseq
  %v132 = vshrl.u32 %v131, 7
  %v133 = vadd.s32 %v132, 8
  %134 = vset.pattern.permute.xlu0 %v133
  %135 = vperm.xlu0 %134, %v124
  %v136 = vpop.permute.xlu0 %135
  %v137 = vlaneseq
  %v138 = vshrl.u32 %v137, 7
  %v139 = vadd.s32 %v138, 16
  %140 = vset.pattern.permute.xlu0 %v139
  %141 = vperm.xlu0 %140, %v124
  %v142 = vpop.permute.xlu0 %141
  %v143 = vlaneseq
  %v144 = vshrl.u32 %v143, 7
  %v145 = vadd.s32 %v144, 24
  %146 = vset.pattern.permute.xlu0 %v145
  %147 = vperm.xlu0 %146, %v124
  %v148 = vpop.permute.xlu0 %147
  %v149 = vlaneseq
  %v150 = vshrl.u32 %v149, 7
  %v151 = vadd.s32 %v150, 32
  %152 = vset.pattern.permute.xlu0 %v151
  %153 = vperm.xlu0 %152, %v124
  %v154 = vpop.permute.xlu0 %153
  %v155 = vlaneseq
  %v156 = vshrl.u32 %v155, 7
  %v157 = vadd.s32 %v156, 40
  %158 = vset.pattern.permute.xlu0 %v157
  %159 = vperm.xlu0 %158, %v124
  %v160 = vpop.permute.xlu0 %159
  %v161 = vlaneseq
  %v162 = vshrl.u32 %v161, 7
  %v163 = vadd.s32 %v162, 48
  %164 = vset.pattern.permute.xlu0 %v163
  %165 = vperm.xlu0 %164, %v124
  %v166 = vpop.permute.xlu0 %165
  %v167 = vlaneseq
  %v168 = vshrl.u32 %v167, 7
  %v169 = vadd.s32 %v168, 56
  %170 = vset.pattern.permute.xlu0 %v169
  %171 = vperm.xlu0 %170, %v124
  %v172 = vpop.permute.xlu0 %171
  %v173 = vlaneseq
  %v174 = vshrl.u32 %v173, 7
  %v175 = vadd.s32 %v174, 64
  %176 = vset.pattern.permute.xlu0 %v175
  %177 = vperm.xlu0 %176, %v124
  %v178 = vpop.permute.xlu0 %177
  %v179 = vlaneseq
  %v180 = vshrl.u32 %v179, 7
  %v181 = vadd.s32 %v180, 72
  %182 = vset.pattern.permute.xlu0 %v181
  %183 = vperm.xlu0 %182, %v124
  %v184 = vpop.permute.xlu0 %183
  %v185 = vlaneseq
  %v186 = vshrl.u32 %v185, 7
  %v187 = vadd.s32 %v186, 80
  %188 = vset.pattern.permute.xlu0 %v187
  %189 = vperm.xlu0 %188, %v124
  %v190 = vpop.permute.xlu0 %189
  %v191 = vlaneseq
  %v192 = vshrl.u32 %v191, 7
  %v193 = vadd.s32 %v192, 88
  %194 = vset.pattern.permute.xlu0 %v193
  %195 = vperm.xlu0 %194, %v124
  %v196 = vpop.permute.xlu0 %195
  %v197 = vlaneseq
  %v198 = vshrl.u32 %v197, 7
  %v199 = vadd.s32 %v198, 96
  %200 = vset.pattern.permute.xlu0 %v199
  %201 = vperm.xlu0 %200, %v124
  %v202 = vpop.permute.xlu0 %201
  %v203 = vlaneseq
  %v204 = vshrl.u32 %v203, 7
  %v205 = vadd.s32 %v204, 104
  %206 = vset.pattern.permute.xlu0 %v205
  %207 = vperm.xlu0 %206, %v124
  %v208 = vpop.permute.xlu0 %207
  %v209 = vlaneseq
  %v210 = vshrl.u32 %v209, 7
  %v211 = vadd.s32 %v210, 112
  %212 = vset.pattern.permute.xlu0 %v211
  %213 = vperm.xlu0 %212, %v124
  %v214 = vpop.permute.xlu0 %213
  %v215 = vlaneseq
  %v216 = vshrl.u32 %v215, 7
  %v217 = vadd.s32 %v216, 120
  %218 = vset.pattern.permute.xlu0 %v217
  %219 = vperm.xlu0 %218, %v124
  %v220 = vpop.permute.xlu0 %219
  %vm221 = vcmp.eq.s32.totalorder %v33, %v24
  %vm222 = vcmp.eq.s32.totalorder %v39, %v24
  %vm223 = vcmp.eq.s32.totalorder %v45, %v24
  %vm224 = vcmp.eq.s32.totalorder %v51, %v24
  %vm225 = vcmp.eq.s32.totalorder %v57, %v24
  %vm226 = vcmp.eq.s32.totalorder %v63, %v24
  %vm227 = vcmp.eq.s32.totalorder %v69, %v24
  %vm228 = vcmp.eq.s32.totalorder %v75, %v24
  %vm229 = vcmp.eq.s32.totalorder %v81, %v24
  %vm230 = vcmp.eq.s32.totalorder %v87, %v24
  %vm231 = vcmp.eq.s32.totalorder %v93, %v24
  %vm232 = vcmp.eq.s32.totalorder %v99, %v24
  %vm233 = vcmp.eq.s32.totalorder %v105, %v24
  %vm234 = vcmp.eq.s32.totalorder %v111, %v24
  %vm235 = vcmp.eq.s32.totalorder %v117, %v24
  %vm236 = vcmp.eq.s32.totalorder %v123, %v24
  %vm237 = vcmp.eq.s32.totalorder %v130, %v24
  %vm238 = vcmp.eq.s32.totalorder %v136, %v24
  %vm239 = vcmp.eq.s32.totalorder %v142, %v24
  %vm240 = vcmp.eq.s32.totalorder %v148, %v24
  %vm241 = vcmp.eq.s32.totalorder %v154, %v24
  %vm242 = vcmp.eq.s32.totalorder %v160, %v24
  %vm243 = vcmp.eq.s32.totalorder %v166, %v24
  %vm244 = vcmp.eq.s32.totalorder %v172, %v24
  %vm245 = vcmp.eq.s32.totalorder %v178, %v24
  %vm246 = vcmp.eq.s32.totalorder %v184, %v24
  %vm247 = vcmp.eq.s32.totalorder %v190, %v24
  %vm248 = vcmp.eq.s32.totalorder %v196, %v24
  %vm249 = vcmp.eq.s32.totalorder %v202, %v24
  %vm250 = vcmp.eq.s32.totalorder %v208, %v24
  %vm251 = vcmp.eq.s32.totalorder %v214, %v24
  %vm252 = vcmp.eq.s32.totalorder %v220, %v24
  %v253 = vsel %vm221, 1, 0
  %v254 = vsel %vm222, 1, 0
  %v255 = vsel %vm223, 1, 0
  %v256 = vsel %vm224, 1, 0
  %v257 = vsel %vm225, 1, 0
  %v258 = vsel %vm226, 1, 0
  %v259 = vsel %vm227, 1, 0
  %v260 = vsel %vm228, 1, 0
  %v261 = vsel %vm229, 1, 0
  %v262 = vsel %vm230, 1, 0
  %v263 = vsel %vm231, 1, 0
  %v264 = vsel %vm232, 1, 0
  %v265 = vsel %vm233, 1, 0
  %v266 = vsel %vm234, 1, 0
  %v267 = vsel %vm235, 1, 0
  %v268 = vsel %vm236, 1, 0
  %v269 = vsel %vm237, 1, 0
  %v270 = vsel %vm238, 1, 0
  %v271 = vsel %vm239, 1, 0
  %v272 = vsel %vm240, 1, 0
  %v273 = vsel %vm241, 1, 0
  %v274 = vsel %vm242, 1, 0
  %v275 = vsel %vm243, 1, 0
  %v276 = vsel %vm244, 1, 0
  %v277 = vsel %vm245, 1, 0
  %v278 = vsel %vm246, 1, 0
  %v279 = vsel %vm247, 1, 0
  %v280 = vsel %vm248, 1, 0
  %v281 = vsel %vm249, 1, 0
  %v282 = vsel %vm250, 1, 0
  %v283 = vsel %vm251, 1, 0
  %v284 = vsel %vm252, 1, 0
  %v285 = vcvt.s32.f32 %v253
  %v286 = vcvt.s32.f32 %v254
  %v287 = vcvt.s32.f32 %v255
  %v288 = vcvt.s32.f32 %v256
  %v289 = vcvt.s32.f32 %v257
  %v290 = vcvt.s32.f32 %v258
  %v291 = vcvt.s32.f32 %v259
  %v292 = vcvt.s32.f32 %v260
  %v293 = vcvt.s32.f32 %v261
  %v294 = vcvt.s32.f32 %v262
  %v295 = vcvt.s32.f32 %v263
  %v296 = vcvt.s32.f32 %v264
  %v297 = vcvt.s32.f32 %v265
  %v298 = vcvt.s32.f32 %v266
  %v299 = vcvt.s32.f32 %v267
  %v300 = vcvt.s32.f32 %v268
  %v301 = vcvt.s32.f32 %v269
  %v302 = vcvt.s32.f32 %v270
  %v303 = vcvt.s32.f32 %v271
  %v304 = vcvt.s32.f32 %v272
  %v305 = vcvt.s32.f32 %v273
  %v306 = vcvt.s32.f32 %v274
  %v307 = vcvt.s32.f32 %v275
  %v308 = vcvt.s32.f32 %v276
  %v309 = vcvt.s32.f32 %v277
  %v310 = vcvt.s32.f32 %v278
  %v311 = vcvt.s32.f32 %v279
  %v312 = vcvt.s32.f32 %v280
  %v313 = vcvt.s32.f32 %v281
  %v314 = vcvt.s32.f32 %v282
  %v315 = vcvt.s32.f32 %v283
  %v316 = vcvt.s32.f32 %v284
  %v317 = vld [vmem:[%s3] sm:$0xff]
  %v318 = vld [vmem:[%s3 + $0x8] sm:$0xff]
  %v319 = vld [vmem:[%s3 + $0x10] sm:$0xff]
  %v320 = vld [vmem:[%s3 + $0x18] sm:$0xff]
  %v321 = vld [vmem:[%s3 + $0x20] sm:$0xff]
  %v322 = vld [vmem:[%s3 + $0x28] sm:$0xff]
  %v323 = vld [vmem:[%s3 + $0x30] sm:$0xff]
  %vm324 = vcmask 457728
  %v326 = vsel %vm324, %v285, 0
  %v329 = vsel %vm324, %v286, 0
  %v332 = vsel %vm324, %v287, 0
  %v335 = vsel %vm324, %v288, 0
  %v338 = vsel %vm324, %v289, 0
  %v341 = vsel %vm324, %v290, 0
  %v344 = vsel %vm324, %v291, 0
  %v347 = vsel %vm324, %v292, 0
  %v350 = vsel %vm324, %v293, 0
  %v353 = vsel %vm324, %v294, 0
  %v356 = vsel %vm324, %v295, 0
  %v359 = vsel %vm324, %v296, 0
  %v362 = vsel %vm324, %v297, 0
  %v365 = vsel %vm324, %v298, 0
  %v368 = vsel %vm324, %v299, 0
  %v371 = vsel %vm324, %v300, 0
  %v374 = vsel %vm324, %v301, 0
  %v377 = vsel %vm324, %v302, 0
  %v380 = vsel %vm324, %v303, 0
  %v383 = vsel %vm324, %v304, 0
  %v386 = vsel %vm324, %v305, 0
  %v389 = vsel %vm324, %v306, 0
  %v392 = vsel %vm324, %v307, 0
  %v395 = vsel %vm324, %v308, 0
  %v398 = vsel %vm324, %v309, 0
  %v401 = vsel %vm324, %v310, 0
  %v404 = vsel %vm324, %v311, 0
  %v407 = vsel %vm324, %v312, 0
  %v410 = vsel %vm324, %v313, 0
  %v413 = vsel %vm324, %v314, 0
  %v416 = vsel %vm324, %v315, 0
  %v419 = vsel %vm324, %v316, 0
  %421 = vmatpush.msra.mxu0 0.0
  %422 = vmatpush.msra.mxu0 0.0
  %423 = vmatpush.msra.mxu0 0.0
  %424 = vmatpush.msra.mxu0 0.0
  %425 = vmatpush.msra.mxu0 0.0
  %426 = vmatpush.msra.mxu0 0.0
  %427 = vmatpush.msra.mxu0 0.0
  %428 = vmatpush.msra.mxu0 0.0
  %429 = vmatpush.msra.mxu0 0.0
  %430 = vmatpush.msra.mxu0 %v323
  %431 = vmatpush.msra.mxu0 %v322
  %432 = vmatpush.msra.mxu0 %v321
  %433 = vmatpush.msra.mxu0 %v320
  %434 = vmatpush.msra.mxu0 %v319
  %435 = vmatpush.msra.mxu0 %v318
  %436 = vmatpush.msra.mxu0 %v317
  %437 = vmatmul.f32.gmra.mxu0 %v326
  %v438 = vpop.f32.mrf.mxu0
  %v439 = vadd.f32 0.0, %v438
  %440 = vmatmul.f32.gmra.mxu0 %v329
  %v441 = vpop.f32.mrf.mxu0
  %v442 = vadd.f32 0.0, %v441
  %443 = vmatmul.f32.gmra.mxu0 %v332
  %v444 = vpop.f32.mrf.mxu0
  %v445 = vadd.f32 0.0, %v444
  %446 = vmatmul.f32.gmra.mxu0 %v335
  %v447 = vpop.f32.mrf.mxu0
  %v448 = vadd.f32 0.0, %v447
  %449 = vmatmul.f32.gmra.mxu0 %v338
  %v450 = vpop.f32.mrf.mxu0
  %v451 = vadd.f32 0.0, %v450
  %452 = vmatmul.f32.gmra.mxu0 %v341
  %v453 = vpop.f32.mrf.mxu0
  %v454 = vadd.f32 0.0, %v453
  %455 = vmatmul.f32.gmra.mxu0 %v344
  %v456 = vpop.f32.mrf.mxu0
  %v457 = vadd.f32 0.0, %v456
  %458 = vmatmul.f32.gmra.mxu0 %v347
  %v459 = vpop.f32.mrf.mxu0
  %v460 = vadd.f32 0.0, %v459
  %461 = vmatmul.f32.gmra.mxu0 %v350
  %v462 = vpop.f32.mrf.mxu0
  %v463 = vadd.f32 0.0, %v462
  %464 = vmatmul.f32.gmra.mxu0 %v353
  %v465 = vpop.f32.mrf.mxu0
  %v466 = vadd.f32 0.0, %v465
  %467 = vmatmul.f32.gmra.mxu0 %v356
  %v468 = vpop.f32.mrf.mxu0
  %v469 = vadd.f32 0.0, %v468
  %470 = vmatmul.f32.gmra.mxu0 %v359
  %v471 = vpop.f32.mrf.mxu0
  %v472 = vadd.f32 0.0, %v471
  %473 = vmatmul.f32.gmra.mxu0 %v362
  %v474 = vpop.f32.mrf.mxu0
  %v475 = vadd.f32 0.0, %v474
  %476 = vmatmul.f32.gmra.mxu0 %v365
  %v477 = vpop.f32.mrf.mxu0
  %v478 = vadd.f32 0.0, %v477
  %479 = vmatmul.f32.gmra.mxu0 %v368
  %v480 = vpop.f32.mrf.mxu0
  %v481 = vadd.f32 0.0, %v480
  %482 = vmatmul.f32.gmra.mxu0 %v371
  %v483 = vpop.f32.mrf.mxu0
  %v484 = vadd.f32 0.0, %v483
  %485 = vmatmul.f32.gmra.mxu0 %v374
  %v486 = vpop.f32.mrf.mxu0
  %v487 = vadd.f32 0.0, %v486
  %488 = vmatmul.f32.gmra.mxu0 %v377
  %v489 = vpop.f32.mrf.mxu0
  %v490 = vadd.f32 0.0, %v489
  %491 = vmatmul.f32.gmra.mxu0 %v380
  %v492 = vpop.f32.mrf.mxu0
  %v493 = vadd.f32 0.0, %v492
  %494 = vmatmul.f32.gmra.mxu0 %v383
  %v495 = vpop.f32.mrf.mxu0
  %v496 = vadd.f32 0.0, %v495
  %497 = vmatmul.f32.gmra.mxu0 %v386
  %v498 = vpop.f32.mrf.mxu0
  %v499 = vadd.f32 0.0, %v498
  %500 = vmatmul.f32.gmra.mxu0 %v389
  %v501 = vpop.f32.mrf.mxu0
  %v502 = vadd.f32 0.0, %v501
  %503 = vmatmul.f32.gmra.mxu0 %v392
  %v504 = vpop.f32.mrf.mxu0
  %v505 = vadd.f32 0.0, %v504
  %506 = vmatmul.f32.gmra.mxu0 %v395
  %v507 = vpop.f32.mrf.mxu0
  %v508 = vadd.f32 0.0, %v507
  %509 = vmatmul.f32.gmra.mxu0 %v398
  %v510 = vpop.f32.mrf.mxu0
  %v511 = vadd.f32 0.0, %v510
  %512 = vmatmul.f32.gmra.mxu0 %v401
  %v513 = vpop.f32.mrf.mxu0
  %v514 = vadd.f32 0.0, %v513
  %515 = vmatmul.f32.gmra.mxu0 %v404
  %v516 = vpop.f32.mrf.mxu0
  %v517 = vadd.f32 0.0, %v516
  %518 = vmatmul.f32.gmra.mxu0 %v407
  %v519 = vpop.f32.mrf.mxu0
  %v520 = vadd.f32 0.0, %v519
  %521 = vmatmul.f32.gmra.mxu0 %v410
  %v522 = vpop.f32.mrf.mxu0
  %v523 = vadd.f32 0.0, %v522
  %524 = vmatmul.f32.gmra.mxu0 %v413
  %v525 = vpop.f32.mrf.mxu0
  %v526 = vadd.f32 0.0, %v525
  %527 = vmatmul.f32.gmra.mxu0 %v416
  %v528 = vpop.f32.mrf.mxu0
  %v529 = vadd.f32 0.0, %v528
  %530 = vmatmul.f32.gmra.mxu0 %v419
  %v531 = vpop.f32.mrf.mxu0
  %v532 = vadd.f32 0.0, %v531
  %533 = vdwg.mxu0
  %v534 = vperm.slane %v21, 0
  %v535 = vperm.slane %v21, 1
  %v536 = vperm.slane %v534, 0
  %v537 = vlaneseq
  %v538 = vshrl.u32 %v537, 7
  %540 = vset.pattern.permute.xlu0 %v538
  %541 = vperm.xlu0 %540, %v536
  %v542 = vpop.permute.xlu0 %541
  %v543 = vlaneseq
  %v544 = vshrl.u32 %v543, 7
  %v545 = vadd.s32 %v544, 8
  %546 = vset.pattern.permute.xlu0 %v545
  %547 = vperm.xlu0 %546, %v536
  %v548 = vpop.permute.xlu0 %547
  %v549 = vlaneseq
  %v550 = vshrl.u32 %v549, 7
  %v551 = vadd.s32 %v550, 16
  %552 = vset.pattern.permute.xlu0 %v551
  %553 = vperm.xlu0 %552, %v536
  %v554 = vpop.permute.xlu0 %553
  %v555 = vlaneseq
  %v556 = vshrl.u32 %v555, 7
  %v557 = vadd.s32 %v556, 24
  %558 = vset.pattern.permute.xlu0 %v557
  %559 = vperm.xlu0 %558, %v536
  %v560 = vpop.permute.xlu0 %559
  %v561 = vlaneseq
  %v562 = vshrl.u32 %v561, 7
  %v563 = vadd.s32 %v562, 32
  %564 = vset.pattern.permute.xlu0 %v563
  %565 = vperm.xlu0 %564, %v536
  %v566 = vpop.permute.xlu0 %565
  %v567 = vlaneseq
  %v568 = vshrl.u32 %v567, 7
  %v569 = vadd.s32 %v568, 40
  %570 = vset.pattern.permute.xlu0 %v569
  %571 = vperm.xlu0 %570, %v536
  %v572 = vpop.permute.xlu0 %571
  %v573 = vlaneseq
  %v574 = vshrl.u32 %v573, 7
  %v575 = vadd.s32 %v574, 48
  %576 = vset.pattern.permute.xlu0 %v575
  %577 = vperm.xlu0 %576, %v536
  %v578 = vpop.permute.xlu0 %577
  %v579 = vlaneseq
  %v580 = vshrl.u32 %v579, 7
  %v581 = vadd.s32 %v580, 56
  %582 = vset.pattern.permute.xlu0 %v581
  %583 = vperm.xlu0 %582, %v536
  %v584 = vpop.permute.xlu0 %583
  %v585 = vlaneseq
  %v586 = vshrl.u32 %v585, 7
  %v587 = vadd.s32 %v586, 64
  %588 = vset.pattern.permute.xlu0 %v587
  %589 = vperm.xlu0 %588, %v536
  %v590 = vpop.permute.xlu0 %589
  %v591 = vlaneseq
  %v592 = vshrl.u32 %v591, 7
  %v593 = vadd.s32 %v592, 72
  %594 = vset.pattern.permute.xlu0 %v593
  %595 = vperm.xlu0 %594, %v536
  %v596 = vpop.permute.xlu0 %595
  %v597 = vlaneseq
  %v598 = vshrl.u32 %v597, 7
  %v599 = vadd.s32 %v598, 80
  %600 = vset.pattern.permute.xlu0 %v599
  %601 = vperm.xlu0 %600, %v536
  %v602 = vpop.permute.xlu0 %601
  %v603 = vlaneseq
  %v604 = vshrl.u32 %v603, 7
  %v605 = vadd.s32 %v604, 88
  %606 = vset.pattern.permute.xlu0 %v605
  %607 = vperm.xlu0 %606, %v536
  %v608 = vpop.permute.xlu0 %607
  %v609 = vlaneseq
  %v610 = vshrl.u32 %v609, 7
  %v611 = vadd.s32 %v610, 96
  %612 = vset.pattern.permute.xlu0 %v611
  %613 = vperm.xlu0 %612, %v536
  %v614 = vpop.permute.xlu0 %613
  %v615 = vlaneseq
  %v616 = vshrl.u32 %v615, 7
  %v617 = vadd.s32 %v616, 104
  %618 = vset.pattern.permute.xlu0 %v617
  %619 = vperm.xlu0 %618, %v536
  %v620 = vpop.permute.xlu0 %619
  %v621 = vlaneseq
  %v622 = vshrl.u32 %v621, 7
  %v623 = vadd.s32 %v622, 112
  %624 = vset.pattern.permute.xlu0 %v623
  %625 = vperm.xlu0 %624, %v536
  %v626 = vpop.permute.xlu0 %625
  %v627 = vlaneseq
  %v628 = vshrl.u32 %v627, 7
  %v629 = vadd.s32 %v628, 120
  %630 = vset.pattern.permute.xlu0 %v629
  %631 = vperm.xlu0 %630, %v536
  %v632 = vpop.permute.xlu0 %631
  %v633 = vperm.slane %v535, 0
  %v634 = vlaneseq
  %v635 = vshrl.u32 %v634, 7
  %637 = vset.pattern.permute.xlu0 %v635
  %638 = vperm.xlu0 %637, %v633
  %v639 = vpop.permute.xlu0 %638
  %v640 = vlaneseq
  %v641 = vshrl.u32 %v640, 7
  %v642 = vadd.s32 %v641, 8
  %643 = vset.pattern.permute.xlu0 %v642
  %644 = vperm.xlu0 %643, %v633
  %v645 = vpop.permute.xlu0 %644
  %v646 = vlaneseq
  %v647 = vshrl.u32 %v646, 7
  %v648 = vadd.s32 %v647, 16
  %649 = vset.pattern.permute.xlu0 %v648
  %650 = vperm.xlu0 %649, %v633
  %v651 = vpop.permute.xlu0 %650
  %v652 = vlaneseq
  %v653 = vshrl.u32 %v652, 7
  %v654 = vadd.s32 %v653, 24
  %655 = vset.pattern.permute.xlu0 %v654
  %656 = vperm.xlu0 %655, %v633
  %v657 = vpop.permute.xlu0 %656
  %v658 = vlaneseq
  %v659 = vshrl.u32 %v658, 7
  %v660 = vadd.s32 %v659, 32
  %661 = vset.pattern.permute.xlu0 %v660
  %662 = vperm.xlu0 %661, %v633
  %v663 = vpop.permute.xlu0 %662
  %v664 = vlaneseq
  %v665 = vshrl.u32 %v664, 7
  %v666 = vadd.s32 %v665, 40
  %667 = vset.pattern.permute.xlu0 %v666
  %668 = vperm.xlu0 %667, %v633
  %v669 = vpop.permute.xlu0 %668
  %v670 = vlaneseq
  %v671 = vshrl.u32 %v670, 7
  %v672 = vadd.s32 %v671, 48
  %673 = vset.pattern.permute.xlu0 %v672
  %674 = vperm.xlu0 %673, %v633
  %v675 = vpop.permute.xlu0 %674
  %v676 = vlaneseq
  %v677 = vshrl.u32 %v676, 7
  %v678 = vadd.s32 %v677, 56
  %679 = vset.pattern.permute.xlu0 %v678
  %680 = vperm.xlu0 %679, %v633
  %v681 = vpop.permute.xlu0 %680
  %v682 = vlaneseq
  %v683 = vshrl.u32 %v682, 7
  %v684 = vadd.s32 %v683, 64
  %685 = vset.pattern.permute.xlu0 %v684
  %686 = vperm.xlu0 %685, %v633
  %v687 = vpop.permute.xlu0 %686
  %v688 = vlaneseq
  %v689 = vshrl.u32 %v688, 7
  %v690 = vadd.s32 %v689, 72
  %691 = vset.pattern.permute.xlu0 %v690
  %692 = vperm.xlu0 %691, %v633
  %v693 = vpop.permute.xlu0 %692
  %v694 = vlaneseq
  %v695 = vshrl.u32 %v694, 7
  %v696 = vadd.s32 %v695, 80
  %697 = vset.pattern.permute.xlu0 %v696
  %698 = vperm.xlu0 %697, %v633
  %v699 = vpop.permute.xlu0 %698
  %v700 = vlaneseq
  %v701 = vshrl.u32 %v700, 7
  %v702 = vadd.s32 %v701, 88
  %703 = vset.pattern.permute.xlu0 %v702
  %704 = vperm.xlu0 %703, %v633
  %v705 = vpop.permute.xlu0 %704
  %v706 = vlaneseq
  %v707 = vshrl.u32 %v706, 7
  %v708 = vadd.s32 %v707, 96
  %709 = vset.pattern.permute.xlu0 %v708
  %710 = vperm.xlu0 %709, %v633
  %v711 = vpop.permute.xlu0 %710
  %v712 = vlaneseq
  %v713 = vshrl.u32 %v712, 7
  %v714 = vadd.s32 %v713, 104
  %715 = vset.pattern.permute.xlu0 %v714
  %716 = vperm.xlu0 %715, %v633
  %v717 = vpop.permute.xlu0 %716
  %v718 = vlaneseq
  %v719 = vshrl.u32 %v718, 7
  %v720 = vadd.s32 %v719, 112
  %721 = vset.pattern.permute.xlu0 %v720
  %722 = vperm.xlu0 %721, %v633
  %v723 = vpop.permute.xlu0 %722
  %v724 = vlaneseq
  %v725 = vshrl.u32 %v724, 7
  %v726 = vadd.s32 %v725, 120
  %727 = vset.pattern.permute.xlu0 %v726
  %728 = vperm.xlu0 %727, %v633
  %v729 = vpop.permute.xlu0 %728
  %vm730 = vcmp.eq.s32.totalorder %v542, %v24
  %vm731 = vcmp.eq.s32.totalorder %v548, %v24
  %vm732 = vcmp.eq.s32.totalorder %v554, %v24
  %vm733 = vcmp.eq.s32.totalorder %v560, %v24
  %vm734 = vcmp.eq.s32.totalorder %v566, %v24
  %vm735 = vcmp.eq.s32.totalorder %v572, %v24
  %vm736 = vcmp.eq.s32.totalorder %v578, %v24
  %vm737 = vcmp.eq.s32.totalorder %v584, %v24
  %vm738 = vcmp.eq.s32.totalorder %v590, %v24
  %vm739 = vcmp.eq.s32.totalorder %v596, %v24
  %vm740 = vcmp.eq.s32.totalorder %v602, %v24
  %vm741 = vcmp.eq.s32.totalorder %v608, %v24
  %vm742 = vcmp.eq.s32.totalorder %v614, %v24
  %vm743 = vcmp.eq.s32.totalorder %v620, %v24
  %vm744 = vcmp.eq.s32.totalorder %v626, %v24
  %vm745 = vcmp.eq.s32.totalorder %v632, %v24
  %vm746 = vcmp.eq.s32.totalorder %v639, %v24
  %vm747 = vcmp.eq.s32.totalorder %v645, %v24
  %vm748 = vcmp.eq.s32.totalorder %v651, %v24
  %vm749 = vcmp.eq.s32.totalorder %v657, %v24
  %vm750 = vcmp.eq.s32.totalorder %v663, %v24
  %vm751 = vcmp.eq.s32.totalorder %v669, %v24
  %vm752 = vcmp.eq.s32.totalorder %v675, %v24
  %vm753 = vcmp.eq.s32.totalorder %v681, %v24
  %vm754 = vcmp.eq.s32.totalorder %v687, %v24
  %vm755 = vcmp.eq.s32.totalorder %v693, %v24
  %vm756 = vcmp.eq.s32.totalorder %v699, %v24
  %vm757 = vcmp.eq.s32.totalorder %v705, %v24
  %vm758 = vcmp.eq.s32.totalorder %v711, %v24
  %vm759 = vcmp.eq.s32.totalorder %v717, %v24
  %vm760 = vcmp.eq.s32.totalorder %v723, %v24
  %vm761 = vcmp.eq.s32.totalorder %v729, %v24
  %v762 = vsel %vm730, 1, 0
  %v763 = vsel %vm731, 1, 0
  %v764 = vsel %vm732, 1, 0
  %v765 = vsel %vm733, 1, 0
  %v766 = vsel %vm734, 1, 0
  %v767 = vsel %vm735, 1, 0
  %v768 = vsel %vm736, 1, 0
  %v769 = vsel %vm737, 1, 0
  %v770 = vsel %vm738, 1, 0
  %v771 = vsel %vm739, 1, 0
  %v772 = vsel %vm740, 1, 0
  %v773 = vsel %vm741, 1, 0
  %v774 = vsel %vm742, 1, 0
  %v775 = vsel %vm743, 1, 0
  %v776 = vsel %vm744, 1, 0
  %v777 = vsel %vm745, 1, 0
  %v778 = vsel %vm746, 1, 0
  %v779 = vsel %vm747, 1, 0
  %v780 = vsel %vm748, 1, 0
  %v781 = vsel %vm749, 1, 0
  %v782 = vsel %vm750, 1, 0
  %v783 = vsel %vm751, 1, 0
  %v784 = vsel %vm752, 1, 0
  %v785 = vsel %vm753, 1, 0
  %v786 = vsel %vm754, 1, 0
  %v787 = vsel %vm755, 1, 0
  %v788 = vsel %vm756, 1, 0
  %v789 = vsel %vm757, 1, 0
  %v790 = vsel %vm758, 1, 0
  %v791 = vsel %vm759, 1, 0
  %v792 = vsel %vm760, 1, 0
  %v793 = vsel %vm761, 1, 0
  %v794 = vcvt.s32.f32 %v762
  %v795 = vcvt.s32.f32 %v763
  %v796 = vcvt.s32.f32 %v764
  %v797 = vcvt.s32.f32 %v765
  %v798 = vcvt.s32.f32 %v766
  %v799 = vcvt.s32.f32 %v767
  %v800 = vcvt.s32.f32 %v768
  %v801 = vcvt.s32.f32 %v769
  %v802 = vcvt.s32.f32 %v770
  %v803 = vcvt.s32.f32 %v771
  %v804 = vcvt.s32.f32 %v772
  %v805 = vcvt.s32.f32 %v773
  %v806 = vcvt.s32.f32 %v774
  %v807 = vcvt.s32.f32 %v775
  %v808 = vcvt.s32.f32 %v776
  %v809 = vcvt.s32.f32 %v777
  %v810 = vcvt.s32.f32 %v778
  %v811 = vcvt.s32.f32 %v779
  %v812 = vcvt.s32.f32 %v780
  %v813 = vcvt.s32.f32 %v781
  %v814 = vcvt.s32.f32 %v782
  %v815 = vcvt.s32.f32 %v783
  %v816 = vcvt.s32.f32 %v784
  %v817 = vcvt.s32.f32 %v785
  %v818 = vcvt.s32.f32 %v786
  %v819 = vcvt.s32.f32 %v787
  %v820 = vcvt.s32.f32 %v788
  %v821 = vcvt.s32.f32 %v789
  %v822 = vcvt.s32.f32 %v790
  %v823 = vcvt.s32.f32 %v791
  %v824 = vcvt.s32.f32 %v792
  %v825 = vcvt.s32.f32 %v793
  %v826 = vperm.slane %v22, 0
  %v827 = vperm.slane %v22, 1
  %v828 = vperm.slane %v826, 0
  %v829 = vlaneseq
  %v830 = vshrl.u32 %v829, 7
  %832 = vset.pattern.permute.xlu0 %v830
  %833 = vperm.xlu0 %832, %v828
  %v834 = vpop.permute.xlu0 %833
  %v835 = vlaneseq
  %v836 = vshrl.u32 %v835, 7
  %v837 = vadd.s32 %v836, 8
  %838 = vset.pattern.permute.xlu0 %v837
  %839 = vperm.xlu0 %838, %v828
  %v840 = vpop.permute.xlu0 %839
  %v841 = vlaneseq
  %v842 = vshrl.u32 %v841, 7
  %v843 = vadd.s32 %v842, 16
  %844 = vset.pattern.permute.xlu0 %v843
  %845 = vperm.xlu0 %844, %v828
  %v846 = vpop.permute.xlu0 %845
  %v847 = vlaneseq
  %v848 = vshrl.u32 %v847, 7
  %v849 = vadd.s32 %v848, 24
  %850 = vset.pattern.permute.xlu0 %v849
  %851 = vperm.xlu0 %850, %v828
  %v852 = vpop.permute.xlu0 %851
  %v853 = vlaneseq
  %v854 = vshrl.u32 %v853, 7
  %v855 = vadd.s32 %v854, 32
  %856 = vset.pattern.permute.xlu0 %v855
  %857 = vperm.xlu0 %856, %v828
  %v858 = vpop.permute.xlu0 %857
  %v859 = vlaneseq
  %v860 = vshrl.u32 %v859, 7
  %v861 = vadd.s32 %v860, 40
  %862 = vset.pattern.permute.xlu0 %v861
  %863 = vperm.xlu0 %862, %v828
  %v864 = vpop.permute.xlu0 %863
  %v865 = vlaneseq
  %v866 = vshrl.u32 %v865, 7
  %v867 = vadd.s32 %v866, 48
  %868 = vset.pattern.permute.xlu0 %v867
  %869 = vperm.xlu0 %868, %v828
  %v870 = vpop.permute.xlu0 %869
  %v871 = vlaneseq
  %v872 = vshrl.u32 %v871, 7
  %v873 = vadd.s32 %v872, 56
  %874 = vset.pattern.permute.xlu0 %v873
  %875 = vperm.xlu0 %874, %v828
  %v876 = vpop.permute.xlu0 %875
  %v877 = vlaneseq
  %v878 = vshrl.u32 %v877, 7
  %v879 = vadd.s32 %v878, 64
  %880 = vset.pattern.permute.xlu0 %v879
  %881 = vperm.xlu0 %880, %v828
  %v882 = vpop.permute.xlu0 %881
  %v883 = vlaneseq
  %v884 = vshrl.u32 %v883, 7
  %v885 = vadd.s32 %v884, 72
  %886 = vset.pattern.permute.xlu0 %v885
  %887 = vperm.xlu0 %886, %v828
  %v888 = vpop.permute.xlu0 %887
  %v889 = vlaneseq
  %v890 = vshrl.u32 %v889, 7
  %v891 = vadd.s32 %v890, 80
  %892 = vset.pattern.permute.xlu0 %v891
  %893 = vperm.xlu0 %892, %v828
  %v894 = vpop.permute.xlu0 %893
  %v895 = vlaneseq
  %v896 = vshrl.u32 %v895, 7
  %v897 = vadd.s32 %v896, 88
  %898 = vset.pattern.permute.xlu0 %v897
  %899 = vperm.xlu0 %898, %v828
  %v900 = vpop.permute.xlu0 %899
  %v901 = vlaneseq
  %v902 = vshrl.u32 %v901, 7
  %v903 = vadd.s32 %v902, 96
  %904 = vset.pattern.permute.xlu0 %v903
  %905 = vperm.xlu0 %904, %v828
  %v906 = vpop.permute.xlu0 %905
  %v907 = vlaneseq
  %v908 = vshrl.u32 %v907, 7
  %v909 = vadd.s32 %v908, 104
  %910 = vset.pattern.permute.xlu0 %v909
  %911 = vperm.xlu0 %910, %v828
  %v912 = vpop.permute.xlu0 %911
  %v913 = vlaneseq
  %v914 = vshrl.u32 %v913, 7
  %v915 = vadd.s32 %v914, 112
  %916 = vset.pattern.permute.xlu0 %v915
  %917 = vperm.xlu0 %916, %v828
  %v918 = vpop.permute.xlu0 %917
  %v919 = vlaneseq
  %v920 = vshrl.u32 %v919, 7
  %v921 = vadd.s32 %v920, 120
  %922 = vset.pattern.permute.xlu0 %v921
  %923 = vperm.xlu0 %922, %v828
  %v924 = vpop.permute.xlu0 %923
  %v925 = vperm.slane %v827, 0
  %v926 = vlaneseq
  %v927 = vshrl.u32 %v926, 7
  %929 = vset.pattern.permute.xlu0 %v927
  %930 = vperm.xlu0 %929, %v925
  %v931 = vpop.permute.xlu0 %930
  %v932 = vlaneseq
  %v933 = vshrl.u32 %v932, 7
  %v934 = vadd.s32 %v933, 8
  %935 = vset.pattern.permute.xlu0 %v934
  %936 = vperm.xlu0 %935, %v925
  %v937 = vpop.permute.xlu0 %936
  %v938 = vlaneseq
  %v939 = vshrl.u32 %v938, 7
  %v940 = vadd.s32 %v939, 16
  %941 = vset.pattern.permute.xlu0 %v940
  %942 = vperm.xlu0 %941, %v925
  %v943 = vpop.permute.xlu0 %942
  %v944 = vlaneseq
  %v945 = vshrl.u32 %v944, 7
  %v946 = vadd.s32 %v945, 24
  %947 = vset.pattern.permute.xlu0 %v946
  %948 = vperm.xlu0 %947, %v925
  %v949 = vpop.permute.xlu0 %948
  %v950 = vlaneseq
  %v951 = vshrl.u32 %v950, 7
  %v952 = vadd.s32 %v951, 32
  %953 = vset.pattern.permute.xlu0 %v952
  %954 = vperm.xlu0 %953, %v925
  %v955 = vpop.permute.xlu0 %954
  %v956 = vlaneseq
  %v957 = vshrl.u32 %v956, 7
  %v958 = vadd.s32 %v957, 40
  %959 = vset.pattern.permute.xlu0 %v958
  %960 = vperm.xlu0 %959, %v925
  %v961 = vpop.permute.xlu0 %960
  %v962 = vlaneseq
  %v963 = vshrl.u32 %v962, 7
  %v964 = vadd.s32 %v963, 48
  %965 = vset.pattern.permute.xlu0 %v964
  %966 = vperm.xlu0 %965, %v925
  %v967 = vpop.permute.xlu0 %966
  %v968 = vlaneseq
  %v969 = vshrl.u32 %v968, 7
  %v970 = vadd.s32 %v969, 56
  %971 = vset.pattern.permute.xlu0 %v970
  %972 = vperm.xlu0 %971, %v925
  %v973 = vpop.permute.xlu0 %972
  %v974 = vlaneseq
  %v975 = vshrl.u32 %v974, 7
  %v976 = vadd.s32 %v975, 64
  %977 = vset.pattern.permute.xlu0 %v976
  %978 = vperm.xlu0 %977, %v925
  %v979 = vpop.permute.xlu0 %978
  %v980 = vlaneseq
  %v981 = vshrl.u32 %v980, 7
  %v982 = vadd.s32 %v981, 72
  %983 = vset.pattern.permute.xlu0 %v982
  %984 = vperm.xlu0 %983, %v925
  %v985 = vpop.permute.xlu0 %984
  %v986 = vlaneseq
  %v987 = vshrl.u32 %v986, 7
  %v988 = vadd.s32 %v987, 80
  %989 = vset.pattern.permute.xlu0 %v988
  %990 = vperm.xlu0 %989, %v925
  %v991 = vpop.permute.xlu0 %990
  %v992 = vlaneseq
  %v993 = vshrl.u32 %v992, 7
  %v994 = vadd.s32 %v993, 88
  %995 = vset.pattern.permute.xlu0 %v994
  %996 = vperm.xlu0 %995, %v925
  %v997 = vpop.permute.xlu0 %996
  %v998 = vlaneseq
  %v999 = vshrl.u32 %v998, 7
  %v1000 = vadd.s32 %v999, 96
  %1001 = vset.pattern.permute.xlu0 %v1000
  %1002 = vperm.xlu0 %1001, %v925
  %v1003 = vpop.permute.xlu0 %1002
  %v1004 = vlaneseq
  %v1005 = vshrl.u32 %v1004, 7
  %v1006 = vadd.s32 %v1005, 104
  %1007 = vset.pattern.permute.xlu0 %v1006
  %1008 = vperm.xlu0 %1007, %v925
  %v1009 = vpop.permute.xlu0 %1008
  %v1010 = vlaneseq
  %v1011 = vshrl.u32 %v1010, 7
  %v1012 = vadd.s32 %v1011, 112
  %1013 = vset.pattern.permute.xlu0 %v1012
  %1014 = vperm.xlu0 %1013, %v925
  %v1015 = vpop.permute.xlu0 %1014
  %v1016 = vlaneseq
  %v1017 = vshrl.u32 %v1016, 7
  %v1018 = vadd.s32 %v1017, 120
  %1019 = vset.pattern.permute.xlu0 %v1018
  %1020 = vperm.xlu0 %1019, %v925
  %v1021 = vpop.permute.xlu0 %1020
  %vm1022 = vcmp.eq.s32.totalorder %v834, %v24
  %vm1023 = vcmp.eq.s32.totalorder %v840, %v24
  %vm1024 = vcmp.eq.s32.totalorder %v846, %v24
  %vm1025 = vcmp.eq.s32.totalorder %v852, %v24
  %vm1026 = vcmp.eq.s32.totalorder %v858, %v24
  %vm1027 = vcmp.eq.s32.totalorder %v864, %v24
  %vm1028 = vcmp.eq.s32.totalorder %v870, %v24
  %vm1029 = vcmp.eq.s32.totalorder %v876, %v24
  %vm1030 = vcmp.eq.s32.totalorder %v882, %v24
  %vm1031 = vcmp.eq.s32.totalorder %v888, %v24
  %vm1032 = vcmp.eq.s32.totalorder %v894, %v24
  %vm1033 = vcmp.eq.s32.totalorder %v900, %v24
  %vm1034 = vcmp.eq.s32.totalorder %v906, %v24
  %vm1035 = vcmp.eq.s32.totalorder %v912, %v24
  %vm1036 = vcmp.eq.s32.totalorder %v918, %v24
  %vm1037 = vcmp.eq.s32.totalorder %v924, %v24
  %vm1038 = vcmp.eq.s32.totalorder %v931, %v24
  %vm1039 = vcmp.eq.s32.totalorder %v937, %v24
  %vm1040 = vcmp.eq.s32.totalorder %v943, %v24
  %vm1041 = vcmp.eq.s32.totalorder %v949, %v24
  %vm1042 = vcmp.eq.s32.totalorder %v955, %v24
  %vm1043 = vcmp.eq.s32.totalorder %v961, %v24
  %vm1044 = vcmp.eq.s32.totalorder %v967, %v24
  %vm1045 = vcmp.eq.s32.totalorder %v973, %v24
  %vm1046 = vcmp.eq.s32.totalorder %v979, %v24
  %vm1047 = vcmp.eq.s32.totalorder %v985, %v24
  %vm1048 = vcmp.eq.s32.totalorder %v991, %v24
  %vm1049 = vcmp.eq.s32.totalorder %v997, %v24
  %vm1050 = vcmp.eq.s32.totalorder %v1003, %v24
  %vm1051 = vcmp.eq.s32.totalorder %v1009, %v24
  %vm1052 = vcmp.eq.s32.totalorder %v1015, %v24
  %vm1053 = vcmp.eq.s32.totalorder %v1021, %v24
  %v1054 = vsel %vm1022, 1, 0
  %v1055 = vsel %vm1023, 1, 0
  %v1056 = vsel %vm1024, 1, 0
  %v1057 = vsel %vm1025, 1, 0
  %v1058 = vsel %vm1026, 1, 0
  %v1059 = vsel %vm1027, 1, 0
  %v1060 = vsel %vm1028, 1, 0
  %v1061 = vsel %vm1029, 1, 0
  %v1062 = vsel %vm1030, 1, 0
  %v1063 = vsel %vm1031, 1, 0
  %v1064 = vsel %vm1032, 1, 0
  %v1065 = vsel %vm1033, 1, 0
  %v1066 = vsel %vm1034, 1, 0
  %v1067 = vsel %vm1035, 1, 0
  %v1068 = vsel %vm1036, 1, 0
  %v1069 = vsel %vm1037, 1, 0
  %v1070 = vsel %vm1038, 1, 0
  %v1071 = vsel %vm1039, 1, 0
  %v1072 = vsel %vm1040, 1, 0
  %v1073 = vsel %vm1041, 1, 0
  %v1074 = vsel %vm1042, 1, 0
  %v1075 = vsel %vm1043, 1, 0
  %v1076 = vsel %vm1044, 1, 0
  %v1077 = vsel %vm1045, 1, 0
  %v1078 = vsel %vm1046, 1, 0
  %v1079 = vsel %vm1047, 1, 0
  %v1080 = vsel %vm1048, 1, 0
  %v1081 = vsel %vm1049, 1, 0
  %v1082 = vsel %vm1050, 1, 0
  %v1083 = vsel %vm1051, 1, 0
  %v1084 = vsel %vm1052, 1, 0
  %v1085 = vsel %vm1053, 1, 0
  %v1086 = vcvt.s32.f32 %v1054
  %v1087 = vcvt.s32.f32 %v1055
  %v1088 = vcvt.s32.f32 %v1056
  %v1089 = vcvt.s32.f32 %v1057
  %v1090 = vcvt.s32.f32 %v1058
  %v1091 = vcvt.s32.f32 %v1059
  %v1092 = vcvt.s32.f32 %v1060
  %v1093 = vcvt.s32.f32 %v1061
  %v1094 = vcvt.s32.f32 %v1062
  %v1095 = vcvt.s32.f32 %v1063
  %v1096 = vcvt.s32.f32 %v1064
  %v1097 = vcvt.s32.f32 %v1065
  %v1098 = vcvt.s32.f32 %v1066
  %v1099 = vcvt.s32.f32 %v1067
  %v1100 = vcvt.s32.f32 %v1068
  %v1101 = vcvt.s32.f32 %v1069
  %v1102 = vcvt.s32.f32 %v1070
  %v1103 = vcvt.s32.f32 %v1071
  %v1104 = vcvt.s32.f32 %v1072
  %v1105 = vcvt.s32.f32 %v1073
  %v1106 = vcvt.s32.f32 %v1074
  %v1107 = vcvt.s32.f32 %v1075
  %v1108 = vcvt.s32.f32 %v1076
  %v1109 = vcvt.s32.f32 %v1077
  %v1110 = vcvt.s32.f32 %v1078
  %v1111 = vcvt.s32.f32 %v1079
  %v1112 = vcvt.s32.f32 %v1080
  %v1113 = vcvt.s32.f32 %v1081
  %v1114 = vcvt.s32.f32 %v1082
  %v1115 = vcvt.s32.f32 %v1083
  %v1116 = vcvt.s32.f32 %v1084
  %v1117 = vcvt.s32.f32 %v1085
  %v1118 = vld [vmem:[%s4] sm:$0xff]
  %v1119 = vld [vmem:[%s4 + $0x8] sm:$0xff]
  %v1120 = vld [vmem:[%s4 + $0x10] sm:$0xff]
  %v1121 = vld [vmem:[%s4 + $0x18] sm:$0xff]
  %v1122 = vld [vmem:[%s4 + $0x20] sm:$0xff]
  %v1123 = vld [vmem:[%s4 + $0x28] sm:$0xff]
  %v1124 = vld [vmem:[%s4 + $0x30] sm:$0xff]
  %v1125 = vld [vmem:[%s4 + $0x38] sm:$0xff]
  %vm1126 = vcmask 523264
  %v1128 = vsel %vm1126, %v794, 0
  %v1131 = vsel %vm1126, %v795, 0
  %v1134 = vsel %vm1126, %v796, 0
  %v1137 = vsel %vm1126, %v797, 0
  %v1140 = vsel %vm1126, %v798, 0
  %v1143 = vsel %vm1126, %v799, 0
  %v1146 = vsel %vm1126, %v800, 0
  %v1149 = vsel %vm1126, %v801, 0
  %v1152 = vsel %vm1126, %v802, 0
  %v1155 = vsel %vm1126, %v803, 0
  %v1158 = vsel %vm1126, %v804, 0
  %v1161 = vsel %vm1126, %v805, 0
  %v1164 = vsel %vm1126, %v806, 0
  %v1167 = vsel %vm1126, %v807, 0
  %v1170 = vsel %vm1126, %v808, 0
  %v1173 = vsel %vm1126, %v809, 0
  %v1176 = vsel %vm1126, %v810, 0
  %v1179 = vsel %vm1126, %v811, 0
  %v1182 = vsel %vm1126, %v812, 0
  %v1185 = vsel %vm1126, %v813, 0
  %v1188 = vsel %vm1126, %v814, 0
  %v1191 = vsel %vm1126, %v815, 0
  %v1194 = vsel %vm1126, %v816, 0
  %v1197 = vsel %vm1126, %v817, 0
  %v1200 = vsel %vm1126, %v818, 0
  %v1203 = vsel %vm1126, %v819, 0
  %v1206 = vsel %vm1126, %v820, 0
  %v1209 = vsel %vm1126, %v821, 0
  %v1212 = vsel %vm1126, %v822, 0
  %v1215 = vsel %vm1126, %v823, 0
  %v1218 = vsel %vm1126, %v824, 0
  %v1221 = vsel %vm1126, %v825, 0
  %v1224 = vsel %vm1126, %v1086, 0
  %v1227 = vsel %vm1126, %v1087, 0
  %v1230 = vsel %vm1126, %v1088, 0
  %v1233 = vsel %vm1126, %v1089, 0
  %v1236 = vsel %vm1126, %v1090, 0
  %v1239 = vsel %vm1126, %v1091, 0
  %v1242 = vsel %vm1126, %v1092, 0
  %v1245 = vsel %vm1126, %v1093, 0
  %v1248 = vsel %vm1126, %v1094, 0
  %v1251 = vsel %vm1126, %v1095, 0
  %v1254 = vsel %vm1126, %v1096, 0
  %v1257 = vsel %vm1126, %v1097, 0
  %v1260 = vsel %vm1126, %v1098, 0
  %v1263 = vsel %vm1126, %v1099, 0
  %v1266 = vsel %vm1126, %v1100, 0
  %v1269 = vsel %vm1126, %v1101, 0
  %v1272 = vsel %vm1126, %v1102, 0
  %v1275 = vsel %vm1126, %v1103, 0
  %v1278 = vsel %vm1126, %v1104, 0
  %v1281 = vsel %vm1126, %v1105, 0
  %v1284 = vsel %vm1126, %v1106, 0
  %v1287 = vsel %vm1126, %v1107, 0
  %v1290 = vsel %vm1126, %v1108, 0
  %v1293 = vsel %vm1126, %v1109, 0
  %v1296 = vsel %vm1126, %v1110, 0
  %v1299 = vsel %vm1126, %v1111, 0
  %v1302 = vsel %vm1126, %v1112, 0
  %v1305 = vsel %vm1126, %v1113, 0
  %v1308 = vsel %vm1126, %v1114, 0
  %v1311 = vsel %vm1126, %v1115, 0
  %v1314 = vsel %vm1126, %v1116, 0
  %v1317 = vsel %vm1126, %v1117, 0
  %1319 = vmatpush.msra.mxu0 0.0
  %1320 = vmatpush.msra.mxu0 0.0
  %1321 = vmatpush.msra.mxu0 0.0
  %1322 = vmatpush.msra.mxu0 0.0
  %1323 = vmatpush.msra.mxu0 0.0
  %1324 = vmatpush.msra.mxu0 0.0
  %1325 = vmatpush.msra.mxu0 0.0
  %1326 = vmatpush.msra.mxu0 0.0
  %1327 = vmatpush.msra.mxu0 %v1125
  %1328 = vmatpush.msra.mxu0 %v1124
  %1329 = vmatpush.msra.mxu0 %v1123
  %1330 = vmatpush.msra.mxu0 %v1122
  %1331 = vmatpush.msra.mxu0 %v1121
  %1332 = vmatpush.msra.mxu0 %v1120
  %1333 = vmatpush.msra.mxu0 %v1119
  %1334 = vmatpush.msra.mxu0 %v1118
  %1335 = vmatmul.f32.gmra.mxu0 %v1128
  %v1336 = vpop.f32.mrf.mxu0
  %v1337 = vadd.f32 0.0, %v1336
  %1338 = vmatmul.f32.gmra.mxu0 %v1131
  %v1339 = vpop.f32.mrf.mxu0
  %v1340 = vadd.f32 0.0, %v1339
  %1341 = vmatmul.f32.gmra.mxu0 %v1134
  %v1342 = vpop.f32.mrf.mxu0
  %v1343 = vadd.f32 0.0, %v1342
  %1344 = vmatmul.f32.gmra.mxu0 %v1137
  %v1345 = vpop.f32.mrf.mxu0
  %v1346 = vadd.f32 0.0, %v1345
  %1347 = vmatmul.f32.gmra.mxu0 %v1140
  %v1348 = vpop.f32.mrf.mxu0
  %v1349 = vadd.f32 0.0, %v1348
  %1350 = vmatmul.f32.gmra.mxu0 %v1143
  %v1351 = vpop.f32.mrf.mxu0
  %v1352 = vadd.f32 0.0, %v1351
  %1353 = vmatmul.f32.gmra.mxu0 %v1146
  %v1354 = vpop.f32.mrf.mxu0
  %v1355 = vadd.f32 0.0, %v1354
  %1356 = vmatmul.f32.gmra.mxu0 %v1149
  %v1357 = vpop.f32.mrf.mxu0
  %v1358 = vadd.f32 0.0, %v1357
  %1359 = vmatmul.f32.gmra.mxu0 %v1152
  %v1360 = vpop.f32.mrf.mxu0
  %v1361 = vadd.f32 0.0, %v1360
  %1362 = vmatmul.f32.gmra.mxu0 %v1155
  %v1363 = vpop.f32.mrf.mxu0
  %v1364 = vadd.f32 0.0, %v1363
  %1365 = vmatmul.f32.gmra.mxu0 %v1158
  %v1366 = vpop.f32.mrf.mxu0
  %v1367 = vadd.f32 0.0, %v1366
  %1368 = vmatmul.f32.gmra.mxu0 %v1161
  %v1369 = vpop.f32.mrf.mxu0
  %v1370 = vadd.f32 0.0, %v1369
  %1371 = vmatmul.f32.gmra.mxu0 %v1164
  %v1372 = vpop.f32.mrf.mxu0
  %v1373 = vadd.f32 0.0, %v1372
  %1374 = vmatmul.f32.gmra.mxu0 %v1167
  %v1375 = vpop.f32.mrf.mxu0
  %v1376 = vadd.f32 0.0, %v1375
  %1377 = vmatmul.f32.gmra.mxu0 %v1170
  %v1378 = vpop.f32.mrf.mxu0
  %v1379 = vadd.f32 0.0, %v1378
  %1380 = vmatmul.f32.gmra.mxu0 %v1173
  %v1381 = vpop.f32.mrf.mxu0
  %v1382 = vadd.f32 0.0, %v1381
  %1383 = vmatmul.f32.gmra.mxu0 %v1176
  %v1384 = vpop.f32.mrf.mxu0
  %v1385 = vadd.f32 0.0, %v1384
  %1386 = vmatmul.f32.gmra.mxu0 %v1179
  %v1387 = vpop.f32.mrf.mxu0
  %v1388 = vadd.f32 0.0, %v1387
  %1389 = vmatmul.f32.gmra.mxu0 %v1182
  %v1390 = vpop.f32.mrf.mxu0
  %v1391 = vadd.f32 0.0, %v1390
  %1392 = vmatmul.f32.gmra.mxu0 %v1185
  %v1393 = vpop.f32.mrf.mxu0
  %v1394 = vadd.f32 0.0, %v1393
  %1395 = vmatmul.f32.gmra.mxu0 %v1188
  %v1396 = vpop.f32.mrf.mxu0
  %v1397 = vadd.f32 0.0, %v1396
  %1398 = vmatmul.f32.gmra.mxu0 %v1191
  %v1399 = vpop.f32.mrf.mxu0
  %v1400 = vadd.f32 0.0, %v1399
  %1401 = vmatmul.f32.gmra.mxu0 %v1194
  %v1402 = vpop.f32.mrf.mxu0
  %v1403 = vadd.f32 0.0, %v1402
  %1404 = vmatmul.f32.gmra.mxu0 %v1197
  %v1405 = vpop.f32.mrf.mxu0
  %v1406 = vadd.f32 0.0, %v1405
  %1407 = vmatmul.f32.gmra.mxu0 %v1200
  %v1408 = vpop.f32.mrf.mxu0
  %v1409 = vadd.f32 0.0, %v1408
  %1410 = vmatmul.f32.gmra.mxu0 %v1203
  %v1411 = vpop.f32.mrf.mxu0
  %v1412 = vadd.f32 0.0, %v1411
  %1413 = vmatmul.f32.gmra.mxu0 %v1206
  %v1414 = vpop.f32.mrf.mxu0
  %v1415 = vadd.f32 0.0, %v1414
  %1416 = vmatmul.f32.gmra.mxu0 %v1209
  %v1417 = vpop.f32.mrf.mxu0
  %v1418 = vadd.f32 0.0, %v1417
  %1419 = vmatmul.f32.gmra.mxu0 %v1212
  %v1420 = vpop.f32.mrf.mxu0
  %v1421 = vadd.f32 0.0, %v1420
  %1422 = vmatmul.f32.gmra.mxu0 %v1215
  %v1423 = vpop.f32.mrf.mxu0
  %v1424 = vadd.f32 0.0, %v1423
  %1425 = vmatmul.f32.gmra.mxu0 %v1218
  %v1426 = vpop.f32.mrf.mxu0
  %v1427 = vadd.f32 0.0, %v1426
  %1428 = vmatmul.f32.gmra.mxu0 %v1221
  %v1429 = vpop.f32.mrf.mxu0
  %v1430 = vadd.f32 0.0, %v1429
  %1431 = vmatmul.f32.gmra.mxu0 %v1224
  %v1432 = vpop.f32.mrf.mxu0
  %v1433 = vadd.f32 0.0, %v1432
  %1434 = vmatmul.f32.gmra.mxu0 %v1227
  %v1435 = vpop.f32.mrf.mxu0
  %v1436 = vadd.f32 0.0, %v1435
  %1437 = vmatmul.f32.gmra.mxu0 %v1230
  %v1438 = vpop.f32.mrf.mxu0
  %v1439 = vadd.f32 0.0, %v1438
  %1440 = vmatmul.f32.gmra.mxu0 %v1233
  %v1441 = vpop.f32.mrf.mxu0
  %v1442 = vadd.f32 0.0, %v1441
  %1443 = vmatmul.f32.gmra.mxu0 %v1236
  %v1444 = vpop.f32.mrf.mxu0
  %v1445 = vadd.f32 0.0, %v1444
  %1446 = vmatmul.f32.gmra.mxu0 %v1239
  %v1447 = vpop.f32.mrf.mxu0
  %v1448 = vadd.f32 0.0, %v1447
  %1449 = vmatmul.f32.gmra.mxu0 %v1242
  %v1450 = vpop.f32.mrf.mxu0
  %v1451 = vadd.f32 0.0, %v1450
  %1452 = vmatmul.f32.gmra.mxu0 %v1245
  %v1453 = vpop.f32.mrf.mxu0
  %v1454 = vadd.f32 0.0, %v1453
  %1455 = vmatmul.f32.gmra.mxu0 %v1248
  %v1456 = vpop.f32.mrf.mxu0
  %v1457 = vadd.f32 0.0, %v1456
  %1458 = vmatmul.f32.gmra.mxu0 %v1251
  %v1459 = vpop.f32.mrf.mxu0
  %v1460 = vadd.f32 0.0, %v1459
  %1461 = vmatmul.f32.gmra.mxu0 %v1254
  %v1462 = vpop.f32.mrf.mxu0
  %v1463 = vadd.f32 0.0, %v1462
  %1464 = vmatmul.f32.gmra.mxu0 %v1257
  %v1465 = vpop.f32.mrf.mxu0
  %v1466 = vadd.f32 0.0, %v1465
  %1467 = vmatmul.f32.gmra.mxu0 %v1260
  %v1468 = vpop.f32.mrf.mxu0
  %v1469 = vadd.f32 0.0, %v1468
  %1470 = vmatmul.f32.gmra.mxu0 %v1263
  %v1471 = vpop.f32.mrf.mxu0
  %v1472 = vadd.f32 0.0, %v1471
  %1473 = vmatmul.f32.gmra.mxu0 %v1266
  %v1474 = vpop.f32.mrf.mxu0
  %v1475 = vadd.f32 0.0, %v1474
  %1476 = vmatmul.f32.gmra.mxu0 %v1269
  %v1477 = vpop.f32.mrf.mxu0
  %v1478 = vadd.f32 0.0, %v1477
  %1479 = vmatmul.f32.gmra.mxu0 %v1272
  %v1480 = vpop.f32.mrf.mxu0
  %v1481 = vadd.f32 0.0, %v1480
  %1482 = vmatmul.f32.gmra.mxu0 %v1275
  %v1483 = vpop.f32.mrf.mxu0
  %v1484 = vadd.f32 0.0, %v1483
  %1485 = vmatmul.f32.gmra.mxu0 %v1278
  %v1486 = vpop.f32.mrf.mxu0
  %v1487 = vadd.f32 0.0, %v1486
  %1488 = vmatmul.f32.gmra.mxu0 %v1281
  %v1489 = vpop.f32.mrf.mxu0
  %v1490 = vadd.f32 0.0, %v1489
  %1491 = vmatmul.f32.gmra.mxu0 %v1284
  %v1492 = vpop.f32.mrf.mxu0
  %v1493 = vadd.f32 0.0, %v1492
  %1494 = vmatmul.f32.gmra.mxu0 %v1287
  %v1495 = vpop.f32.mrf.mxu0
  %v1496 = vadd.f32 0.0, %v1495
  %1497 = vmatmul.f32.gmra.mxu0 %v1290
  %v1498 = vpop.f32.mrf.mxu0
  %v1499 = vadd.f32 0.0, %v1498
  %1500 = vmatmul.f32.gmra.mxu0 %v1293
  %v1501 = vpop.f32.mrf.mxu0
  %v1502 = vadd.f32 0.0, %v1501
  %1503 = vmatmul.f32.gmra.mxu0 %v1296
  %v1504 = vpop.f32.mrf.mxu0
  %v1505 = vadd.f32 0.0, %v1504
  %1506 = vmatmul.f32.gmra.mxu0 %v1299
  %v1507 = vpop.f32.mrf.mxu0
  %v1508 = vadd.f32 0.0, %v1507
  %1509 = vmatmul.f32.gmra.mxu0 %v1302
  %v1510 = vpop.f32.mrf.mxu0
  %v1511 = vadd.f32 0.0, %v1510
  %1512 = vmatmul.f32.gmra.mxu0 %v1305
  %v1513 = vpop.f32.mrf.mxu0
  %v1514 = vadd.f32 0.0, %v1513
  %1515 = vmatmul.f32.gmra.mxu0 %v1308
  %v1516 = vpop.f32.mrf.mxu0
  %v1517 = vadd.f32 0.0, %v1516
  %1518 = vmatmul.f32.gmra.mxu0 %v1311
  %v1519 = vpop.f32.mrf.mxu0
  %v1520 = vadd.f32 0.0, %v1519
  %1521 = vmatmul.f32.gmra.mxu0 %v1314
  %v1522 = vpop.f32.mrf.mxu0
  %v1523 = vadd.f32 0.0, %v1522
  %1524 = vmatmul.f32.gmra.mxu0 %v1317
  %v1525 = vpop.f32.mrf.mxu0
  %v1526 = vadd.f32 0.0, %v1525
  %1527 = vdwg.mxu0
  %v1528 = vadd.f32 %v439, %v1337
  %v1529 = vadd.f32 %v442, %v1340
  %v1530 = vadd.f32 %v445, %v1343
  %v1531 = vadd.f32 %v448, %v1346
  %v1532 = vadd.f32 %v451, %v1349
  %v1533 = vadd.f32 %v454, %v1352
  %v1534 = vadd.f32 %v457, %v1355
  %v1535 = vadd.f32 %v460, %v1358
  %v1536 = vadd.f32 %v463, %v1361
  %v1537 = vadd.f32 %v466, %v1364
  %v1538 = vadd.f32 %v469, %v1367
  %v1539 = vadd.f32 %v472, %v1370
  %v1540 = vadd.f32 %v475, %v1373
  %v1541 = vadd.f32 %v478, %v1376
  %v1542 = vadd.f32 %v481, %v1379
  %v1543 = vadd.f32 %v484, %v1382
  %v1544 = vadd.f32 %v487, %v1385
  %v1545 = vadd.f32 %v490, %v1388
  %v1546 = vadd.f32 %v493, %v1391
  %v1547 = vadd.f32 %v496, %v1394
  %v1548 = vadd.f32 %v499, %v1397
  %v1549 = vadd.f32 %v502, %v1400
  %v1550 = vadd.f32 %v505, %v1403
  %v1551 = vadd.f32 %v508, %v1406
  %v1552 = vadd.f32 %v511, %v1409
  %v1553 = vadd.f32 %v514, %v1412
  %v1554 = vadd.f32 %v517, %v1415
  %v1555 = vadd.f32 %v520, %v1418
  %v1556 = vadd.f32 %v523, %v1421
  %v1557 = vadd.f32 %v526, %v1424
  %v1558 = vadd.f32 %v529, %v1427
  %v1559 = vadd.f32 %v532, %v1430
  %vm1560 = vcmask 130048
  %1561 = vst.msk [vmem:[%s5] sm:$0xff] %vm1560, %v1528
  %1562 = vst.msk [vmem:[%s5 + $0x8] sm:$0xff] %vm1560, %v1529
  %1563 = vst.msk [vmem:[%s5 + $0x10] sm:$0xff] %vm1560, %v1530
  %1564 = vst.msk [vmem:[%s5 + $0x18] sm:$0xff] %vm1560, %v1531
  %1565 = vst.msk [vmem:[%s5 + $0x20] sm:$0xff] %vm1560, %v1532
  %1566 = vst.msk [vmem:[%s5 + $0x28] sm:$0xff] %vm1560, %v1533
  %1567 = vst.msk [vmem:[%s5 + $0x30] sm:$0xff] %vm1560, %v1534
  %1568 = vst.msk [vmem:[%s5 + $0x38] sm:$0xff] %vm1560, %v1535
  %1569 = vst.msk [vmem:[%s5 + $0x40] sm:$0xff] %vm1560, %v1536
  %1570 = vst.msk [vmem:[%s5 + $0x48] sm:$0xff] %vm1560, %v1537
  %1571 = vst.msk [vmem:[%s5 + $0x50] sm:$0xff] %vm1560, %v1538
  %1572 = vst.msk [vmem:[%s5 + $0x58] sm:$0xff] %vm1560, %v1539
  %1573 = vst.msk [vmem:[%s5 + $0x60] sm:$0xff] %vm1560, %v1540
  %1574 = vst.msk [vmem:[%s5 + $0x68] sm:$0xff] %vm1560, %v1541
  %1575 = vst.msk [vmem:[%s5 + $0x70] sm:$0xff] %vm1560, %v1542
  %1576 = vst.msk [vmem:[%s5 + $0x78] sm:$0xff] %vm1560, %v1543
  %1577 = vst.msk [vmem:[%s5 + $0x80] sm:$0xff] %vm1560, %v1544
  %1578 = vst.msk [vmem:[%s5 + $0x88] sm:$0xff] %vm1560, %v1545
  %1579 = vst.msk [vmem:[%s5 + $0x90] sm:$0xff] %vm1560, %v1546
  %1580 = vst.msk [vmem:[%s5 + $0x98] sm:$0xff] %vm1560, %v1547
  %1581 = vst.msk [vmem:[%s5 + $0xa0] sm:$0xff] %vm1560, %v1548
  %1582 = vst.msk [vmem:[%s5 + $0xa8] sm:$0xff] %vm1560, %v1549
  %1583 = vst.msk [vmem:[%s5 + $0xb0] sm:$0xff] %vm1560, %v1550
  %1584 = vst.msk [vmem:[%s5 + $0xb8] sm:$0xff] %vm1560, %v1551
  %1585 = vst.msk [vmem:[%s5 + $0xc0] sm:$0xff] %vm1560, %v1552
  %1586 = vst.msk [vmem:[%s5 + $0xc8] sm:$0xff] %vm1560, %v1553
  %1587 = vst.msk [vmem:[%s5 + $0xd0] sm:$0xff] %vm1560, %v1554
  %1588 = vst.msk [vmem:[%s5 + $0xd8] sm:$0xff] %vm1560, %v1555
  %1589 = vst.msk [vmem:[%s5 + $0xe0] sm:$0xff] %vm1560, %v1556
  %1590 = vst.msk [vmem:[%s5 + $0xe8] sm:$0xff] %vm1560, %v1557
  %1591 = vst.msk [vmem:[%s5 + $0xf0] sm:$0xff] %vm1560, %v1558
  %1592 = vst.msk [vmem:[%s5 + $0xf8] sm:$0xff] %vm1560, %v1559
  %1625 = vrot.lane.b32.xlu0 %v1433, 16
  %v1626 = vpop.permute.xlu0 %1625
  %1627 = vrot.lane.b32.xlu0 %v1436, 16
  %v1628 = vpop.permute.xlu0 %1627
  %1629 = vrot.lane.b32.xlu0 %v1439, 16
  %v1630 = vpop.permute.xlu0 %1629
  %1631 = vrot.lane.b32.xlu0 %v1442, 16
  %v1632 = vpop.permute.xlu0 %1631
  %1633 = vrot.lane.b32.xlu0 %v1445, 16
  %v1634 = vpop.permute.xlu0 %1633
  %1635 = vrot.lane.b32.xlu0 %v1448, 16
  %v1636 = vpop.permute.xlu0 %1635
  %1637 = vrot.lane.b32.xlu0 %v1451, 16
  %v1638 = vpop.permute.xlu0 %1637
  %1639 = vrot.lane.b32.xlu0 %v1454, 16
  %v1640 = vpop.permute.xlu0 %1639
  %1641 = vrot.lane.b32.xlu0 %v1457, 16
  %v1642 = vpop.permute.xlu0 %1641
  %1643 = vrot.lane.b32.xlu0 %v1460, 16
  %v1644 = vpop.permute.xlu0 %1643
  %1645 = vrot.lane.b32.xlu0 %v1463, 16
  %v1646 = vpop.permute.xlu0 %1645
  %1647 = vrot.lane.b32.xlu0 %v1466, 16
  %v1648 = vpop.permute.xlu0 %1647
  %1649 = vrot.lane.b32.xlu0 %v1469, 16
  %v1650 = vpop.permute.xlu0 %1649
  %1651 = vrot.lane.b32.xlu0 %v1472, 16
  %v1652 = vpop.permute.xlu0 %1651
  %1653 = vrot.lane.b32.xlu0 %v1475, 16
  %v1654 = vpop.permute.xlu0 %1653
  %1655 = vrot.lane.b32.xlu0 %v1478, 16
  %v1656 = vpop.permute.xlu0 %1655
  %1657 = vrot.lane.b32.xlu0 %v1481, 16
  %v1658 = vpop.permute.xlu0 %1657
  %1659 = vrot.lane.b32.xlu0 %v1484, 16
  %v1660 = vpop.permute.xlu0 %1659
  %1661 = vrot.lane.b32.xlu0 %v1487, 16
  %v1662 = vpop.permute.xlu0 %1661
  %1663 = vrot.lane.b32.xlu0 %v1490, 16
  %v1664 = vpop.permute.xlu0 %1663
  %1665 = vrot.lane.b32.xlu0 %v1493, 16
  %v1666 = vpop.permute.xlu0 %1665
  %1667 = vrot.lane.b32.xlu0 %v1496, 16
  %v1668 = vpop.permute.xlu0 %1667
  %1669 = vrot.lane.b32.xlu0 %v1499, 16
  %v1670 = vpop.permute.xlu0 %1669
  %1671 = vrot.lane.b32.xlu0 %v1502, 16
  %v1672 = vpop.permute.xlu0 %1671
  %1673 = vrot.lane.b32.xlu0 %v1505, 16
  %v1674 = vpop.permute.xlu0 %1673
  %1675 = vrot.lane.b32.xlu0 %v1508, 16
  %v1676 = vpop.permute.xlu0 %1675
  %1677 = vrot.lane.b32.xlu0 %v1511, 16
  %v1678 = vpop.permute.xlu0 %1677
  %1679 = vrot.lane.b32.xlu0 %v1514, 16
  %v1680 = vpop.permute.xlu0 %1679
  %1681 = vrot.lane.b32.xlu0 %v1517, 16
  %v1682 = vpop.permute.xlu0 %1681
  %1683 = vrot.lane.b32.xlu0 %v1520, 16
  %v1684 = vpop.permute.xlu0 %1683
  %1685 = vrot.lane.b32.xlu0 %v1523, 16
  %v1686 = vpop.permute.xlu0 %1685
  %1687 = vrot.lane.b32.xlu0 %v1526, 16
  %v1688 = vpop.permute.xlu0 %1687
  %v1721 = vadd.f32 %v439, %v1626
  %v1722 = vadd.f32 %v442, %v1628
  %v1723 = vadd.f32 %v445, %v1630
  %v1724 = vadd.f32 %v448, %v1632
  %v1725 = vadd.f32 %v451, %v1634
  %v1726 = vadd.f32 %v454, %v1636
  %v1727 = vadd.f32 %v457, %v1638
  %v1728 = vadd.f32 %v460, %v1640
  %v1729 = vadd.f32 %v463, %v1642
  %v1730 = vadd.f32 %v466, %v1644
  %v1731 = vadd.f32 %v469, %v1646
  %v1732 = vadd.f32 %v472, %v1648
  %v1733 = vadd.f32 %v475, %v1650
  %v1734 = vadd.f32 %v478, %v1652
  %v1735 = vadd.f32 %v481, %v1654
  %v1736 = vadd.f32 %v484, %v1656
  %v1737 = vadd.f32 %v487, %v1658
  %v1738 = vadd.f32 %v490, %v1660
  %v1739 = vadd.f32 %v493, %v1662
  %v1740 = vadd.f32 %v496, %v1664
  %v1741 = vadd.f32 %v499, %v1666
  %v1742 = vadd.f32 %v502, %v1668
  %v1743 = vadd.f32 %v505, %v1670
  %v1744 = vadd.f32 %v508, %v1672
  %v1745 = vadd.f32 %v511, %v1674
  %v1746 = vadd.f32 %v514, %v1676
  %v1747 = vadd.f32 %v517, %v1678
  %v1748 = vadd.f32 %v520, %v1680
  %v1749 = vadd.f32 %v523, %v1682
  %v1750 = vadd.f32 %v526, %v1684
  %v1751 = vadd.f32 %v529, %v1686
  %v1752 = vadd.f32 %v532, %v1688
  %vm1753 = vcmask 261248
  %1754 = vst.msk [vmem:[%s5] sm:$0xff] %vm1753, %v1721
  %1755 = vst.msk [vmem:[%s5 + $0x8] sm:$0xff] %vm1753, %v1722
  %1756 = vst.msk [vmem:[%s5 + $0x10] sm:$0xff] %vm1753, %v1723
  %1757 = vst.msk [vmem:[%s5 + $0x18] sm:$0xff] %vm1753, %v1724
  %1758 = vst.msk [vmem:[%s5 + $0x20] sm:$0xff] %vm1753, %v1725
  %1759 = vst.msk [vmem:[%s5 + $0x28] sm:$0xff] %vm1753, %v1726
  %1760 = vst.msk [vmem:[%s5 + $0x30] sm:$0xff] %vm1753, %v1727
  %1761 = vst.msk [vmem:[%s5 + $0x38] sm:$0xff] %vm1753, %v1728
  %1762 = vst.msk [vmem:[%s5 + $0x40] sm:$0xff] %vm1753, %v1729
  %1763 = vst.msk [vmem:[%s5 + $0x48] sm:$0xff] %vm1753, %v1730
  %1764 = vst.msk [vmem:[%s5 + $0x50] sm:$0xff] %vm1753, %v1731
  %1765 = vst.msk [vmem:[%s5 + $0x58] sm:$0xff] %vm1753, %v1732
  %1766 = vst.msk [vmem:[%s5 + $0x60] sm:$0xff] %vm1753, %v1733
  %1767 = vst.msk [vmem:[%s5 + $0x68] sm:$0xff] %vm1753, %v1734
  %1768 = vst.msk [vmem:[%s5 + $0x70] sm:$0xff] %vm1753, %v1735
  %1769 = vst.msk [vmem:[%s5 + $0x78] sm:$0xff] %vm1753, %v1736
  %1770 = vst.msk [vmem:[%s5 + $0x80] sm:$0xff] %vm1753, %v1737
  %1771 = vst.msk [vmem:[%s5 + $0x88] sm:$0xff] %vm1753, %v1738
  %1772 = vst.msk [vmem:[%s5 + $0x90] sm:$0xff] %vm1753, %v1739
  %1773 = vst.msk [vmem:[%s5 + $0x98] sm:$0xff] %vm1753, %v1740
  %1774 = vst.msk [vmem:[%s5 + $0xa0] sm:$0xff] %vm1753, %v1741
  %1775 = vst.msk [vmem:[%s5 + $0xa8] sm:$0xff] %vm1753, %v1742
  %1776 = vst.msk [vmem:[%s5 + $0xb0] sm:$0xff] %vm1753, %v1743
  %1777 = vst.msk [vmem:[%s5 + $0xb8] sm:$0xff] %vm1753, %v1744
  %1778 = vst.msk [vmem:[%s5 + $0xc0] sm:$0xff] %vm1753, %v1745
  %1779 = vst.msk [vmem:[%s5 + $0xc8] sm:$0xff] %vm1753, %v1746
  %1780 = vst.msk [vmem:[%s5 + $0xd0] sm:$0xff] %vm1753, %v1747
  %1781 = vst.msk [vmem:[%s5 + $0xd8] sm:$0xff] %vm1753, %v1748
  %1782 = vst.msk [vmem:[%s5 + $0xe0] sm:$0xff] %vm1753, %v1749
  %1783 = vst.msk [vmem:[%s5 + $0xe8] sm:$0xff] %vm1753, %v1750
  %1784 = vst.msk [vmem:[%s5 + $0xf0] sm:$0xff] %vm1753, %v1751
  %1785 = vst.msk [vmem:[%s5 + $0xf8] sm:$0xff] %vm1753, %v1752
  // Predicated region
  $region22: #{tpu_custom_call.1} parent=0 // pred_check
    _
  $region23: #{tpu_custom_call.1} parent=0 // pred_check_branch
    %1787 = sbr.rel (0) target = $region25
  $region24: #{tpu_custom_call.1} parent=0 // pred_region
    _
  $region25: #{tpu_custom_call.1} parent=0 // pred_fallthru
    _
  // Predicated region
  $region26: #{tpu_custom_call.1} parent=0 // pred_check
    _
  $region27: #{tpu_custom_call.1} parent=0 // pred_check_branch
    %1789 = sbr.rel (0) target = $region29
  $region28: #{tpu_custom_call.1} parent=0 // pred_region
    _
  $region29: #{tpu_custom_call.1} parent=0 // pred_fallthru
    _

</llo_original>
